<compile_context>
chip_gen: v7x
topology: tpu7x:2x2x1
jax: 0.10.0
libtpu: 0.0.40
codegen_flags: <defaults>
</compile_context>

<pallas_src>
import functools

import jax
import jax.numpy as jnp
from jax.experimental import pallas as pl
from jax.experimental.pallas import tpu as pltpu


def _round_up(x, m):
    return (x + m - 1) // m * m


def _gru_kernel(x_ref, h0_ref, wi_ref, wh_ref, bi_ref, bhn_ref, out_ref, xp_ref):
    """Whole GRU recurrence in a single kernel invocation.

    x_ref  : (T*Bp, Ip)  bf16, time-major flattened inputs (row t*Bp + b)
    h0_ref : (Bp, Hp)    f32, initial hidden state (zero in padded lanes/rows)
    wi_ref : (Ip, 3*Hp)  bf16, fused [Wir | Wiz | Win] (pre-transposed, padded)
    wh_ref : (Hp, 3*Hp)  bf16, fused [Whr | Whz | Whn]
    bi_ref : (1, 3*Hp)   f32, fused [bir+bhr | biz+bhz | bin]
    bhn_ref: (1, Hp)     f32, b_hn (must stay inside the r*(...) term)
    out_ref: (Bp, Hp)    f32, final hidden state
    xp_ref : (T*Bp, 3*Hp) f32 VMEM scratch for the hoisted input projection
    """
    TBp = x_ref.shape[0]
    Bp, Hp = h0_ref.shape
    T = TBp // Bp

    # Hoisted input projection for all timesteps: one bf16 MXU matmul with
    # f32 accumulation, staged in VMEM scratch (keeps it out of vregs across
    # the unrolled recurrence; loop reads are cheap dense ref loads).
    xp_ref[...] = jnp.dot(x_ref[...], wi_ref[...],
                          preferred_element_type=jnp.float32) + bi_ref[...]

    h = h0_ref[...]                                    # f32, resident in vregs
    wh = wh_ref[...]                                    # bf16
    bhn = jnp.broadcast_to(bhn_ref[...], (Bp, Hp))      # hoisted: 1 broadcast, not T

    def sigmoid(v):
        # 0.5*(1+tanh(0.5*x)): a single EUP push instead of exp + reciprocal.
        return 0.5 * (1.0 + jnp.tanh(0.5 * v))

    # Fully unrolled static time loop: one fused bf16 matmul per step on the
    # MXU, tanh on the EUP, gate blend in f32 on the VPU.
    for t in range(T):
        gxr = xp_ref[pl.ds(t * Bp, Bp), pl.ds(0, Hp)]        # static, tile-aligned
        gxz = xp_ref[pl.ds(t * Bp, Bp), pl.ds(Hp, Hp)]
        gxn = xp_ref[pl.ds(t * Bp, Bp), pl.ds(2 * Hp, Hp)]
        gh = jnp.dot(h.astype(jnp.bfloat16), wh,
                     preferred_element_type=jnp.float32)     # (Bp, 3Hp) f32
        r = sigmoid(gxr + gh[:, :Hp])
        z = sigmoid(gxz + gh[:, Hp:2 * Hp])
        n = jnp.tanh(gxn + r * (gh[:, 2 * Hp:] + bhn))
        h = (1.0 - z) * n + z * h

    out_ref[...] = h


def fuse_gru_params(params, input_size, hidden3):
    """One-time parameter prep (NOT on the forward path).

    Fuses the three gates, zero-pads to dense (sublane, lane) tiles and casts
    the matmul weights to bf16.  Padded rows/columns are zero so padded lanes
    never leak into real state.
    """
    Ip = _round_up(input_size, 128)   # lane-dense contraction for x @ Wi
    Hp = _round_up(hidden3, 128)      # lane-dense hidden width

    def pad2(a, rows, cols):
        r, c = a.shape
        return jnp.pad(a, ((0, rows - r), (0, cols - c)))

    wi = jnp.concatenate([pad2(params["wir"], Ip, Hp),
                          pad2(params["wiz"], Ip, Hp),
                          pad2(params["win"], Ip, Hp)], axis=1)          # (Ip, 3Hp)
    wh = jnp.concatenate([pad2(params["whr"], Hp, Hp),
                          pad2(params["whz"], Hp, Hp),
                          pad2(params["whn"], Hp, Hp)], axis=1)          # (Hp, 3Hp)
    bi = jnp.concatenate([pad2(params["bir"] + params["bhr"], 1, Hp),
                          pad2(params["biz"] + params["bhz"], 1, Hp),
                          pad2(params["bin"], 1, Hp)], axis=1)           # (1, 3Hp)
    bhn = pad2(params["bhn"], 1, Hp)                                     # (1, Hp)

    return {
        "wi": wi.astype(jnp.bfloat16),
        "wh": wh.astype(jnp.bfloat16),
        "bi": bi.astype(jnp.float32),
        "bhn": bhn.astype(jnp.float32),
    }


def vrnn_forward(x, h, fused, hidden3):
    """Pallas VRNN forward.

    x: (B, T, I) float32 (batch_first, like the PyTorch module)
    h: (1, B, H3) float32 or None (None -> zeros, like self.hidden_state)
    fused: dict from fuse_gru_params (precomputed once at init)
    returns: (1, B, H3) final GRU hidden state.
    """
    B, T, I = x.shape
    H3 = hidden3
    Ip = fused["wi"].shape[0]
    Hp = fused["bhn"].shape[1]

    if h is None:
        h = jnp.zeros((1, B, H3), jnp.float32)
    h = h.astype(jnp.float32)
    if T == 0:                       # no timesteps: hidden state unchanged
        return h

    Bp = _round_up(B, 8)             # sublane-dense batch

    # Only input-dependent prep remains on the forward path: batch/lane pad,
    # time-major flatten, bf16 cast.  Tiny; fused by XLA under jit.
    x_pad = jnp.pad(x.astype(jnp.float32), ((0, Bp - B), (0, 0), (0, Ip - I)))
    x_tb = jnp.transpose(x_pad, (1, 0, 2)).reshape(T * Bp, Ip).astype(jnp.bfloat16)

    h0 = jnp.pad(h[0], ((0, Bp - B), (0, Hp - H3)))

    vmem_spec = pl.BlockSpec(memory_space=pltpu.MemorySpace.VMEM)
    out_pad = pl.pallas_call(
        _gru_kernel,
        out_shape=jax.ShapeDtypeStruct((Bp, Hp), jnp.float32),
        in_specs=[vmem_spec] * 6,
        out_specs=vmem_spec,
        scratch_shapes=[pltpu.VMEM((T * Bp, 3 * Hp), jnp.float32)],
        compiler_params=pltpu.CompilerParams(vmem_limit_bytes=32 * 1024 * 1024),
    )(x_tb, h0, fused["wi"], fused["wh"], fused["bi"], fused["bhn"])

    return out_pad[:B, :H3][None]    # (1, B, H3), matching torch.nn.GRU


def init_params(key, input_size, hidden3):
    """Deterministic synthetic GRU parameters (PyTorch gate order r, z, n)."""
    ks = jax.random.split(key, 12)
    scale = 0.1

    def w(k, shape):
        return (scale * jax.random.normal(k, shape)).astype(jnp.float32)

    return {
        # input->hidden weights, pre-transposed to (I, H3)
        "wir": w(ks[0], (input_size, hidden3)),
        "wiz": w(ks[1], (input_size, hidden3)),
        "win": w(ks[2], (input_size, hidden3)),
        # hidden->hidden weights, pre-transposed to (H3, H3)
        "whr": w(ks[3], (hidden3, hidden3)),
        "whz": w(ks[4], (hidden3, hidden3)),
        "whn": w(ks[5], (hidden3, hidden3)),
        # biases (b_ih and b_hh kept separate, as in PyTorch)
        "bir": w(ks[6], (1, hidden3)),
        "biz": w(ks[7], (1, hidden3)),
        "bin": w(ks[8], (1, hidden3)),
        "bhr": w(ks[9], (1, hidden3)),
        "bhz": w(ks[10], (1, hidden3)),
        "bhn": w(ks[11], (1, hidden3)),
    }


def vrnn_forward_ref(x, h, params):
    """Pure-JAX f32 reference GRU (lax.scan) for correctness checking."""
    B, T, I = x.shape
    H3 = params["whr"].shape[0]
    if h is None:
        h = jnp.zeros((1, B, H3), jnp.float32)
    h0 = h[0]

    def step(h_prev, x_t):
        r = jax.nn.sigmoid(x_t @ params["wir"] + params["bir"]
                           + h_prev @ params["whr"] + params["bhr"])
        z = jax.nn.sigmoid(x_t @ params["wiz"] + params["biz"]
                           + h_prev @ params["whz"] + params["bhz"])
        n = jnp.tanh(x_t @ params["win"] + params["bin"]
                     + r * (h_prev @ params["whn"] + params["bhn"]))
        h_new = (1.0 - z) * n + z * h_prev
        return h_new, None

    h_final, _ = jax.lax.scan(step, h0, jnp.transpose(x, (1, 0, 2)))
    return h_final[None]


if __name__ == "__main__":
    # Small shapes consistent with the module:
    # keypoint_size=4 -> input_size = 12; hidden_size=32 -> GRU hidden = 96.
    batch = 4
    seq = 8
    keypoint_size = 4
    hidden_size = 32
    input_size = keypoint_size * 3
    hidden3 = hidden_size * 3

    key = jax.random.PRNGKey(0)
    k_x, k_p = jax.random.split(key)

    x = jax.random.normal(k_x, (batch, seq, input_size), dtype=jnp.float32)
    params = init_params(k_p, input_size, hidden3)

    # One-time init-side weight prep (off the forward path, per perf review).
    fused = fuse_gru_params(params, input_size, hidden3)
    fused = jax.tree_util.tree_map(jax.block_until_ready, fused)

    fwd = jax.jit(functools.partial(vrnn_forward, hidden3=hidden3))

    # h == None path of VRNN.forward (zero initial hidden state).
    out = fwd(x, None, fused)
    out = jax.block_until_ready(out)

    ref = jax.block_until_ready(vrnn_forward_ref(x, None, params))
    assert out.shape == (1, batch, hidden3)
    # bf16 MXU operands (f32 accumulate): relaxed tolerance vs f32 reference.
    assert jnp.allclose(out, ref, atol=3e-2, rtol=3e-2), "Pallas GRU mismatch"

    print("KERNEL_OK")
</pallas_src>

<mosaic_0001>
module attributes {stable_mosaic.version = 11 : i64} {
  func.func @_gru_kernel(%arg0: memref<64x128xbf16, #tpu.memory_space<vmem>>, %arg1: memref<8x128xf32, #tpu.memory_space<vmem>>, %arg2: memref<128x384xbf16, #tpu.memory_space<vmem>>, %arg3: memref<128x384xbf16, #tpu.memory_space<vmem>>, %arg4: memref<1x384xf32, #tpu.memory_space<vmem>>, %arg5: memref<1x128xf32, #tpu.memory_space<vmem>>, %arg6: memref<8x128xf32, #tpu.memory_space<vmem>>, %arg7: memref<64x384xf32, #tpu.memory_space<vmem>>) attributes {dimension_semantics = [], scalar_prefetch = 0 : i64, scratch_operands = 1 : i64, tpu.core_type = #tpu.core_type<tc>} {
    %c0 = arith.constant 0 : index
    %c0_0 = arith.constant 0 : index
    %0 = vector.load %arg0[%c0, %c0_0] : memref<64x128xbf16, #tpu.memory_space<vmem>>, vector<64x128xbf16>
    %c0_1 = arith.constant 0 : index
    %c0_2 = arith.constant 0 : index
    %1 = vector.load %arg2[%c0_1, %c0_2] : memref<128x384xbf16, #tpu.memory_space<vmem>>, vector<128x384xbf16>
    %cst = arith.constant dense<0.000000e+00> : vector<64x384xf32>
    %2 = tpu.matmul %0, %1, %cst {dimension_numbers = #tpu.dot_dimension_numbers<[1], [0], [0], [1], [0, 0, 1, 1], [], []>} : vector<64x128xbf16>, vector<128x384xbf16>, vector<64x384xf32> -> vector<64x384xf32>
    %c0_3 = arith.constant 0 : index
    %c0_4 = arith.constant 0 : index
    %3 = vector.load %arg4[%c0_3, %c0_4] : memref<1x384xf32, #tpu.memory_space<vmem>>, vector<1x384xf32>
    %4 = vector.broadcast %3 : vector<1x384xf32> to vector<64x384xf32>
    %5 = arith.addf %2, %4 : vector<64x384xf32>
    %c0_5 = arith.constant 0 : index
    %c0_6 = arith.constant 0 : index
    %6 = vector.load %arg7[%c0_5, %c0_6] : memref<64x384xf32, #tpu.memory_space<vmem>>, vector<64x384xf32>
    tpu.vector_store %arg7[%c0_5, %c0_6], %5 {strides = array<i32>} : memref<64x384xf32, #tpu.memory_space<vmem>>, vector<64x384xf32>,
    %c0_7 = arith.constant 0 : index
    %c0_8 = arith.constant 0 : index
    %7 = vector.load %arg1[%c0_7, %c0_8] : memref<8x128xf32, #tpu.memory_space<vmem>>, vector<8x128xf32>
    %c0_9 = arith.constant 0 : index
    %c0_10 = arith.constant 0 : index
    %8 = vector.load %arg3[%c0_9, %c0_10] : memref<128x384xbf16, #tpu.memory_space<vmem>>, vector<128x384xbf16>
    %c0_11 = arith.constant 0 : index
    %c0_12 = arith.constant 0 : index
    %9 = vector.load %arg5[%c0_11, %c0_12] : memref<1x128xf32, #tpu.memory_space<vmem>>, vector<1x128xf32>
    %10 = vector.shape_cast %9 : vector<1x128xf32> to vector<1x128xf32>
    %11 = vector.broadcast %10 : vector<1x128xf32> to vector<8x128xf32>
    %c0_13 = arith.constant 0 : index
    %c0_14 = arith.constant 0 : index
    %12 = vector.load %arg7[%c0_13, %c0_14] : memref<64x384xf32, #tpu.memory_space<vmem>>, vector<8x128xf32>
    %c0_15 = arith.constant 0 : index
    %c128 = arith.constant 128 : index
    %13 = vector.load %arg7[%c0_15, %c128] : memref<64x384xf32, #tpu.memory_space<vmem>>, vector<8x128xf32>
    %c0_16 = arith.constant 0 : index
    %c256 = arith.constant 256 : index
    %14 = vector.load %arg7[%c0_16, %c256] : memref<64x384xf32, #tpu.memory_space<vmem>>, vector<8x128xf32>
    %15 = arith.truncf %7 : vector<8x128xf32> to vector<8x128xbf16>
    %cst_17 = arith.constant dense<0.000000e+00> : vector<8x384xf32>
    %16 = tpu.matmul %15, %8, %cst_17 {dimension_numbers = #tpu.dot_dimension_numbers<[1], [0], [0], [1], [0, 0, 1, 1], [], []>} : vector<8x128xbf16>, vector<128x384xbf16>, vector<8x384xf32> -> vector<8x384xf32>
    %17 = vector.extract_strided_slice %16 {offsets = [0, 0], sizes = [8, 128], strides = [1, 1]} : vector<8x384xf32> to vector<8x128xf32>
    %18 = arith.addf %12, %17 : vector<8x128xf32>
    %cst_18 = arith.constant 5.000000e-01 : f32
    %19 = vector.broadcast %cst_18 : f32 to vector<8x128xf32>
    %20 = arith.mulf %19, %18 : vector<8x128xf32>
    %21 = math.tanh %20 : vector<8x128xf32>
    %cst_19 = arith.constant 1.000000e+00 : f32
    %22 = vector.broadcast %cst_19 : f32 to vector<8x128xf32>
    %23 = arith.addf %22, %21 : vector<8x128xf32>
    %cst_20 = arith.constant 5.000000e-01 : f32
    %24 = vector.broadcast %cst_20 : f32 to vector<8x128xf32>
    %25 = arith.mulf %24, %23 : vector<8x128xf32>
    %26 = vector.extract_strided_slice %16 {offsets = [0, 128], sizes = [8, 128], strides = [1, 1]} : vector<8x384xf32> to vector<8x128xf32>
    %27 = arith.addf %13, %26 : vector<8x128xf32>
    %cst_21 = arith.constant 5.000000e-01 : f32
    %28 = vector.broadcast %cst_21 : f32 to vector<8x128xf32>
    %29 = arith.mulf %28, %27 : vector<8x128xf32>
    %30 = math.tanh %29 : vector<8x128xf32>
    %cst_22 = arith.constant 1.000000e+00 : f32
    %31 = vector.broadcast %cst_22 : f32 to vector<8x128xf32>
    %32 = arith.addf %31, %30 : vector<8x128xf32>
    %cst_23 = arith.constant 5.000000e-01 : f32
    %33 = vector.broadcast %cst_23 : f32 to vector<8x128xf32>
    %34 = arith.mulf %33, %32 : vector<8x128xf32>
    %35 = vector.extract_strided_slice %16 {offsets = [0, 256], sizes = [8, 128], strides = [1, 1]} : vector<8x384xf32> to vector<8x128xf32>
    %36 = arith.addf %35, %11 : vector<8x128xf32>
    %37 = arith.mulf %25, %36 : vector<8x128xf32>
    %38 = arith.addf %14, %37 : vector<8x128xf32>
    %39 = math.tanh %38 : vector<8x128xf32>
    %cst_24 = arith.constant 1.000000e+00 : f32
    %40 = vector.broadcast %cst_24 : f32 to vector<8x128xf32>
    %41 = arith.subf %40, %34 : vector<8x128xf32>
    %42 = arith.mulf %41, %39 : vector<8x128xf32>
    %43 = arith.mulf %34, %7 : vector<8x128xf32>
    %44 = arith.addf %42, %43 : vector<8x128xf32>
    %c8 = arith.constant 8 : index
    %c0_25 = arith.constant 0 : index
    %45 = vector.load %arg7[%c8, %c0_25] : memref<64x384xf32, #tpu.memory_space<vmem>>, vector<8x128xf32>
    %c8_26 = arith.constant 8 : index
    %c128_27 = arith.constant 128 : index
    %46 = vector.load %arg7[%c8_26, %c128_27] : memref<64x384xf32, #tpu.memory_space<vmem>>, vector<8x128xf32>
    %c8_28 = arith.constant 8 : index
    %c256_29 = arith.constant 256 : index
    %47 = vector.load %arg7[%c8_28, %c256_29] : memref<64x384xf32, #tpu.memory_space<vmem>>, vector<8x128xf32>
    %48 = arith.truncf %44 : vector<8x128xf32> to vector<8x128xbf16>
    %cst_30 = arith.constant dense<0.000000e+00> : vector<8x384xf32>
    %49 = tpu.matmul %48, %8, %cst_30 {dimension_numbers = #tpu.dot_dimension_numbers<[1], [0], [0], [1], [0, 0, 1, 1], [], []>} : vector<8x128xbf16>, vector<128x384xbf16>, vector<8x384xf32> -> vector<8x384xf32>
    %50 = vector.extract_strided_slice %49 {offsets = [0, 0], sizes = [8, 128], strides = [1, 1]} : vector<8x384xf32> to vector<8x128xf32>
    %51 = arith.addf %45, %50 : vector<8x128xf32>
    %cst_31 = arith.constant 5.000000e-01 : f32
    %52 = vector.broadcast %cst_31 : f32 to vector<8x128xf32>
    %53 = arith.mulf %52, %51 : vector<8x128xf32>
    %54 = math.tanh %53 : vector<8x128xf32>
    %cst_32 = arith.constant 1.000000e+00 : f32
    %55 = vector.broadcast %cst_32 : f32 to vector<8x128xf32>
    %56 = arith.addf %55, %54 : vector<8x128xf32>
    %cst_33 = arith.constant 5.000000e-01 : f32
    %57 = vector.broadcast %cst_33 : f32 to vector<8x128xf32>
    %58 = arith.mulf %57, %56 : vector<8x128xf32>
    %59 = vector.extract_strided_slice %49 {offsets = [0, 128], sizes = [8, 128], strides = [1, 1]} : vector<8x384xf32> to vector<8x128xf32>
    %60 = arith.addf %46, %59 : vector<8x128xf32>
    %cst_34 = arith.constant 5.000000e-01 : f32
    %61 = vector.broadcast %cst_34 : f32 to vector<8x128xf32>
    %62 = arith.mulf %61, %60 : vector<8x128xf32>
    %63 = math.tanh %62 : vector<8x128xf32>
    %cst_35 = arith.constant 1.000000e+00 : f32
    %64 = vector.broadcast %cst_35 : f32 to vector<8x128xf32>
    %65 = arith.addf %64, %63 : vector<8x128xf32>
    %cst_36 = arith.constant 5.000000e-01 : f32
    %66 = vector.broadcast %cst_36 : f32 to vector<8x128xf32>
    %67 = arith.mulf %66, %65 : vector<8x128xf32>
    %68 = vector.extract_strided_slice %49 {offsets = [0, 256], sizes = [8, 128], strides = [1, 1]} : vector<8x384xf32> to vector<8x128xf32>
    %69 = arith.addf %68, %11 : vector<8x128xf32>
    %70 = arith.mulf %58, %69 : vector<8x128xf32>
    %71 = arith.addf %47, %70 : vector<8x128xf32>
    %72 = math.tanh %71 : vector<8x128xf32>
    %cst_37 = arith.constant 1.000000e+00 : f32
    %73 = vector.broadcast %cst_37 : f32 to vector<8x128xf32>
    %74 = arith.subf %73, %67 : vector<8x128xf32>
    %75 = arith.mulf %74, %72 : vector<8x128xf32>
    %76 = arith.mulf %67, %44 : vector<8x128xf32>
    %77 = arith.addf %75, %76 : vector<8x128xf32>
    %c16 = arith.constant 16 : index
    %c0_38 = arith.constant 0 : index
    %78 = vector.load %arg7[%c16, %c0_38] : memref<64x384xf32, #tpu.memory_space<vmem>>, vector<8x128xf32>
    %c16_39 = arith.constant 16 : index
    %c128_40 = arith.constant 128 : index
    %79 = vector.load %arg7[%c16_39, %c128_40] : memref<64x384xf32, #tpu.memory_space<vmem>>, vector<8x128xf32>
    %c16_41 = arith.constant 16 : index
    %c256_42 = arith.constant 256 : index
    %80 = vector.load %arg7[%c16_41, %c256_42] : memref<64x384xf32, #tpu.memory_space<vmem>>, vector<8x128xf32>
    %81 = arith.truncf %77 : vector<8x128xf32> to vector<8x128xbf16>
    %cst_43 = arith.constant dense<0.000000e+00> : vector<8x384xf32>
    %82 = tpu.matmul %81, %8, %cst_43 {dimension_numbers = #tpu.dot_dimension_numbers<[1], [0], [0], [1], [0, 0, 1, 1], [], []>} : vector<8x128xbf16>, vector<128x384xbf16>, vector<8x384xf32> -> vector<8x384xf32>
    %83 = vector.extract_strided_slice %82 {offsets = [0, 0], sizes = [8, 128], strides = [1, 1]} : vector<8x384xf32> to vector<8x128xf32>
    %84 = arith.addf %78, %83 : vector<8x128xf32>
    %cst_44 = arith.constant 5.000000e-01 : f32
    %85 = vector.broadcast %cst_44 : f32 to vector<8x128xf32>
    %86 = arith.mulf %85, %84 : vector<8x128xf32>
    %87 = math.tanh %86 : vector<8x128xf32>
    %cst_45 = arith.constant 1.000000e+00 : f32
    %88 = vector.broadcast %cst_45 : f32 to vector<8x128xf32>
    %89 = arith.addf %88, %87 : vector<8x128xf32>
    %cst_46 = arith.constant 5.000000e-01 : f32
    %90 = vector.broadcast %cst_46 : f32 to vector<8x128xf32>
    %91 = arith.mulf %90, %89 : vector<8x128xf32>
    %92 = vector.extract_strided_slice %82 {offsets = [0, 128], sizes = [8, 128], strides = [1, 1]} : vector<8x384xf32> to vector<8x128xf32>
    %93 = arith.addf %79, %92 : vector<8x128xf32>
    %cst_47 = arith.constant 5.000000e-01 : f32
    %94 = vector.broadcast %cst_47 : f32 to vector<8x128xf32>
    %95 = arith.mulf %94, %93 : vector<8x128xf32>
    %96 = math.tanh %95 : vector<8x128xf32>
    %cst_48 = arith.constant 1.000000e+00 : f32
    %97 = vector.broadcast %cst_48 : f32 to vector<8x128xf32>
    %98 = arith.addf %97, %96 : vector<8x128xf32>
    %cst_49 = arith.constant 5.000000e-01 : f32
    %99 = vector.broadcast %cst_49 : f32 to vector<8x128xf32>
    %100 = arith.mulf %99, %98 : vector<8x128xf32>
    %101 = vector.extract_strided_slice %82 {offsets = [0, 256], sizes = [8, 128], strides = [1, 1]} : vector<8x384xf32> to vector<8x128xf32>
    %102 = arith.addf %101, %11 : vector<8x128xf32>
    %103 = arith.mulf %91, %102 : vector<8x128xf32>
    %104 = arith.addf %80, %103 : vector<8x128xf32>
    %105 = math.tanh %104 : vector<8x128xf32>
    %cst_50 = arith.constant 1.000000e+00 : f32
    %106 = vector.broadcast %cst_50 : f32 to vector<8x128xf32>
    %107 = arith.subf %106, %100 : vector<8x128xf32>
    %108 = arith.mulf %107, %105 : vector<8x128xf32>
    %109 = arith.mulf %100, %77 : vector<8x128xf32>
    %110 = arith.addf %108, %109 : vector<8x128xf32>
    %c24 = arith.constant 24 : index
    %c0_51 = arith.constant 0 : index
    %111 = vector.load %arg7[%c24, %c0_51] : memref<64x384xf32, #tpu.memory_space<vmem>>, vector<8x128xf32>
    %c24_52 = arith.constant 24 : index
    %c128_53 = arith.constant 128 : index
    %112 = vector.load %arg7[%c24_52, %c128_53] : memref<64x384xf32, #tpu.memory_space<vmem>>, vector<8x128xf32>
    %c24_54 = arith.constant 24 : index
    %c256_55 = arith.constant 256 : index
    %113 = vector.load %arg7[%c24_54, %c256_55] : memref<64x384xf32, #tpu.memory_space<vmem>>, vector<8x128xf32>
    %114 = arith.truncf %110 : vector<8x128xf32> to vector<8x128xbf16>
    %cst_56 = arith.constant dense<0.000000e+00> : vector<8x384xf32>
    %115 = tpu.matmul %114, %8, %cst_56 {dimension_numbers = #tpu.dot_dimension_numbers<[1], [0], [0], [1], [0, 0, 1, 1], [], []>} : vector<8x128xbf16>, vector<128x384xbf16>, vector<8x384xf32> -> vector<8x384xf32>
    %116 = vector.extract_strided_slice %115 {offsets = [0, 0], sizes = [8, 128], strides = [1, 1]} : vector<8x384xf32> to vector<8x128xf32>
    %117 = arith.addf %111, %116 : vector<8x128xf32>
    %cst_57 = arith.constant 5.000000e-01 : f32
    %118 = vector.broadcast %cst_57 : f32 to vector<8x128xf32>
    %119 = arith.mulf %118, %117 : vector<8x128xf32>
    %120 = math.tanh %119 : vector<8x128xf32>
    %cst_58 = arith.constant 1.000000e+00 : f32
    %121 = vector.broadcast %cst_58 : f32 to vector<8x128xf32>
    %122 = arith.addf %121, %120 : vector<8x128xf32>
    %cst_59 = arith.constant 5.000000e-01 : f32
    %123 = vector.broadcast %cst_59 : f32 to vector<8x128xf32>
    %124 = arith.mulf %123, %122 : vector<8x128xf32>
    %125 = vector.extract_strided_slice %115 {offsets = [0, 128], sizes = [8, 128], strides = [1, 1]} : vector<8x384xf32> to vector<8x128xf32>
    %126 = arith.addf %112, %125 : vector<8x128xf32>
    %cst_60 = arith.constant 5.000000e-01 : f32
    %127 = vector.broadcast %cst_60 : f32 to vector<8x128xf32>
    %128 = arith.mulf %127, %126 : vector<8x128xf32>
    %129 = math.tanh %128 : vector<8x128xf32>
    %cst_61 = arith.constant 1.000000e+00 : f32
    %130 = vector.broadcast %cst_61 : f32 to vector<8x128xf32>
    %131 = arith.addf %130, %129 : vector<8x128xf32>
    %cst_62 = arith.constant 5.000000e-01 : f32
    %132 = vector.broadcast %cst_62 : f32 to vector<8x128xf32>
    %133 = arith.mulf %132, %131 : vector<8x128xf32>
    %134 = vector.extract_strided_slice %115 {offsets = [0, 256], sizes = [8, 128], strides = [1, 1]} : vector<8x384xf32> to vector<8x128xf32>
    %135 = arith.addf %134, %11 : vector<8x128xf32>
    %136 = arith.mulf %124, %135 : vector<8x128xf32>
    %137 = arith.addf %113, %136 : vector<8x128xf32>
    %138 = math.tanh %137 : vector<8x128xf32>
    %cst_63 = arith.constant 1.000000e+00 : f32
    %139 = vector.broadcast %cst_63 : f32 to vector<8x128xf32>
    %140 = arith.subf %139, %133 : vector<8x128xf32>
    %141 = arith.mulf %140, %138 : vector<8x128xf32>
    %142 = arith.mulf %133, %110 : vector<8x128xf32>
    %143 = arith.addf %141, %142 : vector<8x128xf32>
    %c32 = arith.constant 32 : index
    %c0_64 = arith.constant 0 : index
    %144 = vector.load %arg7[%c32, %c0_64] : memref<64x384xf32, #tpu.memory_space<vmem>>, vector<8x128xf32>
    %c32_65 = arith.constant 32 : index
    %c128_66 = arith.constant 128 : index
    %145 = vector.load %arg7[%c32_65, %c128_66] : memref<64x384xf32, #tpu.memory_space<vmem>>, vector<8x128xf32>
    %c32_67 = arith.constant 32 : index
    %c256_68 = arith.constant 256 : index
    %146 = vector.load %arg7[%c32_67, %c256_68] : memref<64x384xf32, #tpu.memory_space<vmem>>, vector<8x128xf32>
    %147 = arith.truncf %143 : vector<8x128xf32> to vector<8x128xbf16>
    %cst_69 = arith.constant dense<0.000000e+00> : vector<8x384xf32>
    %148 = tpu.matmul %147, %8, %cst_69 {dimension_numbers = #tpu.dot_dimension_numbers<[1], [0], [0], [1], [0, 0, 1, 1], [], []>} : vector<8x128xbf16>, vector<128x384xbf16>, vector<8x384xf32> -> vector<8x384xf32>
    %149 = vector.extract_strided_slice %148 {offsets = [0, 0], sizes = [8, 128], strides = [1, 1]} : vector<8x384xf32> to vector<8x128xf32>
    %150 = arith.addf %144, %149 : vector<8x128xf32>
    %cst_70 = arith.constant 5.000000e-01 : f32
    %151 = vector.broadcast %cst_70 : f32 to vector<8x128xf32>
    %152 = arith.mulf %151, %150 : vector<8x128xf32>
    %153 = math.tanh %152 : vector<8x128xf32>
    %cst_71 = arith.constant 1.000000e+00 : f32
    %154 = vector.broadcast %cst_71 : f32 to vector<8x128xf32>
    %155 = arith.addf %154, %153 : vector<8x128xf32>
    %cst_72 = arith.constant 5.000000e-01 : f32
    %156 = vector.broadcast %cst_72 : f32 to vector<8x128xf32>
    %157 = arith.mulf %156, %155 : vector<8x128xf32>
    %158 = vector.extract_strided_slice %148 {offsets = [0, 128], sizes = [8, 128], strides = [1, 1]} : vector<8x384xf32> to vector<8x128xf32>
    %159 = arith.addf %145, %158 : vector<8x128xf32>
    %cst_73 = arith.constant 5.000000e-01 : f32
    %160 = vector.broadcast %cst_73 : f32 to vector<8x128xf32>
    %161 = arith.mulf %160, %159 : vector<8x128xf32>
    %162 = math.tanh %161 : vector<8x128xf32>
    %cst_74 = arith.constant 1.000000e+00 : f32
    %163 = vector.broadcast %cst_74 : f32 to vector<8x128xf32>
    %164 = arith.addf %163, %162 : vector<8x128xf32>
    %cst_75 = arith.constant 5.000000e-01 : f32
    %165 = vector.broadcast %cst_75 : f32 to vector<8x128xf32>
    %166 = arith.mulf %165, %164 : vector<8x128xf32>
    %167 = vector.extract_strided_slice %148 {offsets = [0, 256], sizes = [8, 128], strides = [1, 1]} : vector<8x384xf32> to vector<8x128xf32>
    %168 = arith.addf %167, %11 : vector<8x128xf32>
    %169 = arith.mulf %157, %168 : vector<8x128xf32>
    %170 = arith.addf %146, %169 : vector<8x128xf32>
    %171 = math.tanh %170 : vector<8x128xf32>
    %cst_76 = arith.constant 1.000000e+00 : f32
    %172 = vector.broadcast %cst_76 : f32 to vector<8x128xf32>
    %173 = arith.subf %172, %166 : vector<8x128xf32>
    %174 = arith.mulf %173, %171 : vector<8x128xf32>
    %175 = arith.mulf %166, %143 : vector<8x128xf32>
    %176 = arith.addf %174, %175 : vector<8x128xf32>
    %c40 = arith.constant 40 : index
    %c0_77 = arith.constant 0 : index
    %177 = vector.load %arg7[%c40, %c0_77] : memref<64x384xf32, #tpu.memory_space<vmem>>, vector<8x128xf32>
    %c40_78 = arith.constant 40 : index
    %c128_79 = arith.constant 128 : index
    %178 = vector.load %arg7[%c40_78, %c128_79] : memref<64x384xf32, #tpu.memory_space<vmem>>, vector<8x128xf32>
    %c40_80 = arith.constant 40 : index
    %c256_81 = arith.constant 256 : index
    %179 = vector.load %arg7[%c40_80, %c256_81] : memref<64x384xf32, #tpu.memory_space<vmem>>, vector<8x128xf32>
    %180 = arith.truncf %176 : vector<8x128xf32> to vector<8x128xbf16>
    %cst_82 = arith.constant dense<0.000000e+00> : vector<8x384xf32>
    %181 = tpu.matmul %180, %8, %cst_82 {dimension_numbers = #tpu.dot_dimension_numbers<[1], [0], [0], [1], [0, 0, 1, 1], [], []>} : vector<8x128xbf16>, vector<128x384xbf16>, vector<8x384xf32> -> vector<8x384xf32>
    %182 = vector.extract_strided_slice %181 {offsets = [0, 0], sizes = [8, 128], strides = [1, 1]} : vector<8x384xf32> to vector<8x128xf32>
    %183 = arith.addf %177, %182 : vector<8x128xf32>
    %cst_83 = arith.constant 5.000000e-01 : f32
    %184 = vector.broadcast %cst_83 : f32 to vector<8x128xf32>
    %185 = arith.mulf %184, %183 : vector<8x128xf32>
    %186 = math.tanh %185 : vector<8x128xf32>
    %cst_84 = arith.constant 1.000000e+00 : f32
    %187 = vector.broadcast %cst_84 : f32 to vector<8x128xf32>
    %188 = arith.addf %187, %186 : vector<8x128xf32>
    %cst_85 = arith.constant 5.000000e-01 : f32
    %189 = vector.broadcast %cst_85 : f32 to vector<8x128xf32>
    %190 = arith.mulf %189, %188 : vector<8x128xf32>
    %191 = vector.extract_strided_slice %181 {offsets = [0, 128], sizes = [8, 128], strides = [1, 1]} : vector<8x384xf32> to vector<8x128xf32>
    %192 = arith.addf %178, %191 : vector<8x128xf32>
    %cst_86 = arith.constant 5.000000e-01 : f32
    %193 = vector.broadcast %cst_86 : f32 to vector<8x128xf32>
    %194 = arith.mulf %193, %192 : vector<8x128xf32>
    %195 = math.tanh %194 : vector<8x128xf32>
    %cst_87 = arith.constant 1.000000e+00 : f32
    %196 = vector.broadcast %cst_87 : f32 to vector<8x128xf32>
    %197 = arith.addf %196, %195 : vector<8x128xf32>
    %cst_88 = arith.constant 5.000000e-01 : f32
    %198 = vector.broadcast %cst_88 : f32 to vector<8x128xf32>
    %199 = arith.mulf %198, %197 : vector<8x128xf32>
    %200 = vector.extract_strided_slice %181 {offsets = [0, 256], sizes = [8, 128], strides = [1, 1]} : vector<8x384xf32> to vector<8x128xf32>
    %201 = arith.addf %200, %11 : vector<8x128xf32>
    %202 = arith.mulf %190, %201 : vector<8x128xf32>
    %203 = arith.addf %179, %202 : vector<8x128xf32>
    %204 = math.tanh %203 : vector<8x128xf32>
    %cst_89 = arith.constant 1.000000e+00 : f32
    %205 = vector.broadcast %cst_89 : f32 to vector<8x128xf32>
    %206 = arith.subf %205, %199 : vector<8x128xf32>
    %207 = arith.mulf %206, %204 : vector<8x128xf32>
    %208 = arith.mulf %199, %176 : vector<8x128xf32>
    %209 = arith.addf %207, %208 : vector<8x128xf32>
    %c48 = arith.constant 48 : index
    %c0_90 = arith.constant 0 : index
    %210 = vector.load %arg7[%c48, %c0_90] : memref<64x384xf32, #tpu.memory_space<vmem>>, vector<8x128xf32>
    %c48_91 = arith.constant 48 : index
    %c128_92 = arith.constant 128 : index
    %211 = vector.load %arg7[%c48_91, %c128_92] : memref<64x384xf32, #tpu.memory_space<vmem>>, vector<8x128xf32>
    %c48_93 = arith.constant 48 : index
    %c256_94 = arith.constant 256 : index
    %212 = vector.load %arg7[%c48_93, %c256_94] : memref<64x384xf32, #tpu.memory_space<vmem>>, vector<8x128xf32>
    %213 = arith.truncf %209 : vector<8x128xf32> to vector<8x128xbf16>
    %cst_95 = arith.constant dense<0.000000e+00> : vector<8x384xf32>
    %214 = tpu.matmul %213, %8, %cst_95 {dimension_numbers = #tpu.dot_dimension_numbers<[1], [0], [0], [1], [0, 0, 1, 1], [], []>} : vector<8x128xbf16>, vector<128x384xbf16>, vector<8x384xf32> -> vector<8x384xf32>
    %215 = vector.extract_strided_slice %214 {offsets = [0, 0], sizes = [8, 128], strides = [1, 1]} : vector<8x384xf32> to vector<8x128xf32>
    %216 = arith.addf %210, %215 : vector<8x128xf32>
    %cst_96 = arith.constant 5.000000e-01 : f32
    %217 = vector.broadcast %cst_96 : f32 to vector<8x128xf32>
    %218 = arith.mulf %217, %216 : vector<8x128xf32>
    %219 = math.tanh %218 : vector<8x128xf32>
    %cst_97 = arith.constant 1.000000e+00 : f32
    %220 = vector.broadcast %cst_97 : f32 to vector<8x128xf32>
    %221 = arith.addf %220, %219 : vector<8x128xf32>
    %cst_98 = arith.constant 5.000000e-01 : f32
    %222 = vector.broadcast %cst_98 : f32 to vector<8x128xf32>
    %223 = arith.mulf %222, %221 : vector<8x128xf32>
    %224 = vector.extract_strided_slice %214 {offsets = [0, 128], sizes = [8, 128], strides = [1, 1]} : vector<8x384xf32> to vector<8x128xf32>
    %225 = arith.addf %211, %224 : vector<8x128xf32>
    %cst_99 = arith.constant 5.000000e-01 : f32
    %226 = vector.broadcast %cst_99 : f32 to vector<8x128xf32>
    %227 = arith.mulf %226, %225 : vector<8x128xf32>
    %228 = math.tanh %227 : vector<8x128xf32>
    %cst_100 = arith.constant 1.000000e+00 : f32
    %229 = vector.broadcast %cst_100 : f32 to vector<8x128xf32>
    %230 = arith.addf %229, %228 : vector<8x128xf32>
    %cst_101 = arith.constant 5.000000e-01 : f32
    %231 = vector.broadcast %cst_101 : f32 to vector<8x128xf32>
    %232 = arith.mulf %231, %230 : vector<8x128xf32>
    %233 = vector.extract_strided_slice %214 {offsets = [0, 256], sizes = [8, 128], strides = [1, 1]} : vector<8x384xf32> to vector<8x128xf32>
    %234 = arith.addf %233, %11 : vector<8x128xf32>
    %235 = arith.mulf %223, %234 : vector<8x128xf32>
    %236 = arith.addf %212, %235 : vector<8x128xf32>
    %237 = math.tanh %236 : vector<8x128xf32>
    %cst_102 = arith.constant 1.000000e+00 : f32
    %238 = vector.broadcast %cst_102 : f32 to vector<8x128xf32>
    %239 = arith.subf %238, %232 : vector<8x128xf32>
    %240 = arith.mulf %239, %237 : vector<8x128xf32>
    %241 = arith.mulf %232, %209 : vector<8x128xf32>
    %242 = arith.addf %240, %241 : vector<8x128xf32>
    %c56 = arith.constant 56 : index
    %c0_103 = arith.constant 0 : index
    %243 = vector.load %arg7[%c56, %c0_103] : memref<64x384xf32, #tpu.memory_space<vmem>>, vector<8x128xf32>
    %c56_104 = arith.constant 56 : index
    %c128_105 = arith.constant 128 : index
    %244 = vector.load %arg7[%c56_104, %c128_105] : memref<64x384xf32, #tpu.memory_space<vmem>>, vector<8x128xf32>
    %c56_106 = arith.constant 56 : index
    %c256_107 = arith.constant 256 : index
    %245 = vector.load %arg7[%c56_106, %c256_107] : memref<64x384xf32, #tpu.memory_space<vmem>>, vector<8x128xf32>
    %246 = arith.truncf %242 : vector<8x128xf32> to vector<8x128xbf16>
    %cst_108 = arith.constant dense<0.000000e+00> : vector<8x384xf32>
    %247 = tpu.matmul %246, %8, %cst_108 {dimension_numbers = #tpu.dot_dimension_numbers<[1], [0], [0], [1], [0, 0, 1, 1], [], []>} : vector<8x128xbf16>, vector<128x384xbf16>, vector<8x384xf32> -> vector<8x384xf32>
    %248 = vector.extract_strided_slice %247 {offsets = [0, 0], sizes = [8, 128], strides = [1, 1]} : vector<8x384xf32> to vector<8x128xf32>
    %249 = arith.addf %243, %248 : vector<8x128xf32>
    %cst_109 = arith.constant 5.000000e-01 : f32
    %250 = vector.broadcast %cst_109 : f32 to vector<8x128xf32>
    %251 = arith.mulf %250, %249 : vector<8x128xf32>
    %252 = math.tanh %251 : vector<8x128xf32>
    %cst_110 = arith.constant 1.000000e+00 : f32
    %253 = vector.broadcast %cst_110 : f32 to vector<8x128xf32>
    %254 = arith.addf %253, %252 : vector<8x128xf32>
    %cst_111 = arith.constant 5.000000e-01 : f32
    %255 = vector.broadcast %cst_111 : f32 to vector<8x128xf32>
    %256 = arith.mulf %255, %254 : vector<8x128xf32>
    %257 = vector.extract_strided_slice %247 {offsets = [0, 128], sizes = [8, 128], strides = [1, 1]} : vector<8x384xf32> to vector<8x128xf32>
    %258 = arith.addf %244, %257 : vector<8x128xf32>
    %cst_112 = arith.constant 5.000000e-01 : f32
    %259 = vector.broadcast %cst_112 : f32 to vector<8x128xf32>
    %260 = arith.mulf %259, %258 : vector<8x128xf32>
    %261 = math.tanh %260 : vector<8x128xf32>
    %cst_113 = arith.constant 1.000000e+00 : f32
    %262 = vector.broadcast %cst_113 : f32 to vector<8x128xf32>
    %263 = arith.addf %262, %261 : vector<8x128xf32>
    %cst_114 = arith.constant 5.000000e-01 : f32
    %264 = vector.broadcast %cst_114 : f32 to vector<8x128xf32>
    %265 = arith.mulf %264, %263 : vector<8x128xf32>
    %266 = vector.extract_strided_slice %247 {offsets = [0, 256], sizes = [8, 128], strides = [1, 1]} : vector<8x384xf32> to vector<8x128xf32>
    %267 = arith.addf %266, %11 : vector<8x128xf32>
    %268 = arith.mulf %256, %267 : vector<8x128xf32>
    %269 = arith.addf %245, %268 : vector<8x128xf32>
    %270 = math.tanh %269 : vector<8x128xf32>
    %cst_115 = arith.constant 1.000000e+00 : f32
    %271 = vector.broadcast %cst_115 : f32 to vector<8x128xf32>
    %272 = arith.subf %271, %265 : vector<8x128xf32>
    %273 = arith.mulf %272, %270 : vector<8x128xf32>
    %274 = arith.mulf %265, %242 : vector<8x128xf32>
    %275 = arith.addf %273, %274 : vector<8x128xf32>
    %c0_116 = arith.constant 0 : index
    %c0_117 = arith.constant 0 : index
    %276 = vector.load %arg6[%c0_116, %c0_117] : memref<8x128xf32, #tpu.memory_space<vmem>>, vector<8x128xf32>
    tpu.vector_store %arg6[%c0_116, %c0_117], %275 {strides = array<i32>} : memref<8x128xf32, #tpu.memory_space<vmem>>, vector<8x128xf32>,
    return
  }
}

</mosaic_0001>

<llo_original>
// kernel: squeeze.1
$region0: #{squeeze.1}
  #allocation0 [shape = 's32[1]{0}', space=sflag, size = 0x4, scoped, tag = 'scoped memory for squeeze.1']
  %s0 = inlined_call_operand.<no memory space> [shape: f32[], index: 0, kind: input, shape index: {}]
  %s1 = inlined_call_operand.vmem [shape: f32[4,96], index: 1, kind: output, shape index: {}]
  %v2 = vstv %s0
  %3 = vst [vmem:[%s1] sm:$0xf] %v2

// kernel: vrnn_forward.1
$region0: #{vrnn_forward.1}
  #allocation0 [shape = 'u32[]', space=smem, size = 0x4, offset = 0x4, fixed_abs, tag = 'smem constant byte address 0x4 - core index']
  #allocation1 [shape = 'u32[144,128]{1,0:T(1,128)}', space=vmem, size = 0x12000, scoped, tag = 'internal scratch']
  #allocation2 [shape = 'f32[64,384]{1,0:T(8,128)}', space=vmem, size = 0x18000, scoped, tag = 'scratch operand']
  %s0 = inlined_call_operand.vmem [shape: bf16[64,128], index: 0, kind: input, shape index: {}]
  %s1 = inlined_call_operand.vmem [shape: f32[8,128], index: 1, kind: input, shape index: {}]
  %s2 = inlined_call_operand.hbm [shape: bf16[128,384], index: 2, kind: input, shape index: {}]
  %s3 = inlined_call_operand.hbm [shape: bf16[128,384], index: 3, kind: input, shape index: {}]
  %s4 = inlined_call_operand.vmem [shape: f32[1,384], index: 4, kind: input, shape index: {}]
  %s5 = inlined_call_operand.vmem [shape: f32[1,128], index: 5, kind: input, shape index: {}]
  %s6 = inlined_call_operand.vmem [shape: f32[8,128], index: 6, kind: output, shape index: {}]
  %s7 = sld [smem:[#allocation0]]
  $region42: #{vrnn_forward.1} parent=0
    _
  %s9 = ssub.s32 1, %s7
  %s10 = scalar_select 0, %s9, %s7
  $region1: #{vrnn_forward.1} parent=0
    #allocation3 [shape = 'u8[98304]{0}', space=vmem, size = 0x18000, scoped, tag = 'input window, operand 2, single buffered']
    #allocation4 [shape = 's32[1]{0}', space=sflag, size = 0x4, scoped, tag = 'scoped memory for vrnn_forward.1']
    #allocation5 [shape = 'u8[98304]{0}', space=vmem, size = 0x18000, scoped, tag = 'input window, operand 3, single buffered']
    #allocation6 [shape = 's32[1]{0}', space=sflag, size = 0x4, scoped, tag = 'scoped memory for vrnn_forward.1']
    %11 = vsyncpa [#allocation4], 0
    %12 = vsyncpa [#allocation6], 0
    // Predicated region
    $region2: #{vrnn_forward.1} parent=1 // pred_check
      _
    $region3: #{vrnn_forward.1} parent=1 // pred_check_branch
      %14 = sbr.rel (0) target = $region5
    $region4: #{vrnn_forward.1} parent=1 // pred_region
      _
    $region5: #{vrnn_forward.1} parent=1 // pred_fallthru
      _
    // Predicated region
    $region6: #{vrnn_forward.1} parent=1 // pred_check
      _
    $region7: #{vrnn_forward.1} parent=1 // pred_check_branch
      %16 = sbr.rel (0) target = $region9
    $region8: #{vrnn_forward.1} parent=1 // pred_region
      _
    $region9: #{vrnn_forward.1} parent=1 // pred_fallthru
      _
    // Predicated region
    $region10: #{vrnn_forward.1} parent=1 // pred_check
      _
    $region11: #{vrnn_forward.1} parent=1 // pred_check_branch
      %18 = sbr.rel (0) target = $region13
    $region12: #{vrnn_forward.1} parent=1 // pred_region
      %s20 = ssub.s32 3072, 3072
      %21 = vsyncadd [#allocation4], %s20
      %s22 = sshll.u32 [#allocation3], 4
      %s23 = int_to_ptr.vmem [resolvable:$true] %s22
      %28 = dma.hbm_to_vmem [thread:$0]  %s2, 3072, %s23, [#allocation4], 192, 192, 12
    $region13: #{vrnn_forward.1} parent=1 // pred_fallthru
      _
    // Predicated region
    $region14: #{vrnn_forward.1} parent=1 // pred_check
      _
    $region15: #{vrnn_forward.1} parent=1 // pred_check_branch
      %30 = sbr.rel (0) target = $region17
    $region16: #{vrnn_forward.1} parent=1 // pred_region
      %s32 = ssub.s32 3072, 3072
      %33 = vsyncadd [#allocation6], %s32
      %s34 = sshll.u32 [#allocation5], 4
      %s35 = int_to_ptr.vmem [resolvable:$true] %s34
      %40 = dma.hbm_to_vmem [thread:$0]  %s3, 3072, %s35, [#allocation6], 192, 192, 12
    $region17: #{vrnn_forward.1} parent=1 // pred_fallthru
      _
    // Predicated region
    $region18: #{vrnn_forward.1} parent=1 // pred_check
      _
    $region19: #{vrnn_forward.1} parent=1 // pred_check_branch
      %42 = sbr.rel (0) target = $region21
    $region20: #{vrnn_forward.1} parent=1 // pred_region
      _
    $region21: #{vrnn_forward.1} parent=1 // pred_fallthru
      _
    // Predicated region
    $region22: #{vrnn_forward.1} parent=1 // pred_check
      _
    $region23: #{vrnn_forward.1} parent=1 // pred_check_branch
      %44 = sbr.rel (0) target = $region25
    $region24: #{vrnn_forward.1} parent=1 // pred_region
      _
    $region25: #{vrnn_forward.1} parent=1 // pred_fallthru
      _
    // Predicated region
    $region26: #{vrnn_forward.1} parent=1 // pred_check
      _
    $region27: #{vrnn_forward.1} parent=1 // pred_check_branch
      %46 = sbr.rel (0) target = $region29
    $region28: #{vrnn_forward.1} parent=1 // pred_region
      %47 = dma.done [#allocation4], 3072
    $region29: #{vrnn_forward.1} parent=1 // pred_fallthru
      _
    // Predicated region
    $region30: #{vrnn_forward.1} parent=1 // pred_check
      _
    $region31: #{vrnn_forward.1} parent=1 // pred_check_branch
      %49 = sbr.rel (0) target = $region33
    $region32: #{vrnn_forward.1} parent=1 // pred_region
      %50 = dma.done [#allocation6], 3072
    $region33: #{vrnn_forward.1} parent=1 // pred_fallthru
      _
    %v52 = vld [vmem:[%s0] sm:$0xf]
    %v53 = vld [vmem:[%s0 + $0x4] sm:$0xf]
    %v54 = vld [vmem:[%s0 + $0x8] sm:$0xf]
    %v55 = vld [vmem:[%s0 + $0xc] sm:$0xf]
    %v56 = vld [vmem:[%s0 + $0x10] sm:$0xf]
    %v57 = vld [vmem:[%s0 + $0x14] sm:$0xf]
    %v58 = vld [vmem:[%s0 + $0x18] sm:$0xf]
    %v59 = vld [vmem:[%s0 + $0x1c] sm:$0xf]
    %v60 = vld [vmem:[#allocation3] sm:$0xff]
    %v61 = vld [vmem:[#allocation3 + $0x8] sm:$0xf]
    %v62 = vld [vmem:[#allocation3 + $0xc] sm:$0xff]
    %v63 = vld [vmem:[#allocation3 + $0x14] sm:$0xf]
    %v64 = vld [vmem:[#allocation3 + $0x18] sm:$0xff]
    %v65 = vld [vmem:[#allocation3 + $0x20] sm:$0xf]
    %v66 = vld [vmem:[#allocation3 + $0x24] sm:$0xff]
    %v67 = vld [vmem:[#allocation3 + $0x2c] sm:$0xf]
    %v68 = vld [vmem:[#allocation3 + $0x30] sm:$0xff]
    %v69 = vld [vmem:[#allocation3 + $0x38] sm:$0xf]
    %v70 = vld [vmem:[#allocation3 + $0x3c] sm:$0xff]
    %v71 = vld [vmem:[#allocation3 + $0x44] sm:$0xf]
    %v72 = vld [vmem:[#allocation3 + $0x48] sm:$0xff]
    %v73 = vld [vmem:[#allocation3 + $0x50] sm:$0xf]
    %v74 = vld [vmem:[#allocation3 + $0x54] sm:$0xff]
    %v75 = vld [vmem:[#allocation3 + $0x5c] sm:$0xf]
    %v76 = vld [vmem:[#allocation3 + $0x60] sm:$0xff]
    %v77 = vld [vmem:[#allocation3 + $0x68] sm:$0xf]
    %v78 = vld [vmem:[#allocation3 + $0x6c] sm:$0xff]
    %v79 = vld [vmem:[#allocation3 + $0x74] sm:$0xf]
    %v80 = vld [vmem:[#allocation3 + $0x78] sm:$0xff]
    %v81 = vld [vmem:[#allocation3 + $0x80] sm:$0xf]
    %v82 = vld [vmem:[#allocation3 + $0x84] sm:$0xff]
    %v83 = vld [vmem:[#allocation3 + $0x8c] sm:$0xf]
    %v84 = vld [vmem:[#allocation3 + $0x90] sm:$0xff]
    %v85 = vld [vmem:[#allocation3 + $0x98] sm:$0xf]
    %v86 = vld [vmem:[#allocation3 + $0x9c] sm:$0xff]
    %v87 = vld [vmem:[#allocation3 + $0xa4] sm:$0xf]
    %v88 = vld [vmem:[#allocation3 + $0xa8] sm:$0xff]
    %v89 = vld [vmem:[#allocation3 + $0xb0] sm:$0xf]
    %v90 = vld [vmem:[#allocation3 + $0xb4] sm:$0xff]
    %v91 = vld [vmem:[#allocation3 + $0xbc] sm:$0xf]
    %v92 = vld [vmem:[%s4] sm:$0x7]
    %v94 = vlaneseq
    %v95 = vshrl.u32 %v94, 7
    %v96 = vsub.s32 0, %v95
    %v97 = vrot.slane %v92, %v96
    %v98 = vlaneseq
    %v99 = vshrl.u32 %v98, 7
    %v100 = vsub.s32 1, %v99
    %v101 = vrot.slane %v92, %v100
    %v102 = vlaneseq
    %v103 = vshrl.u32 %v102, 7
    %v104 = vsub.s32 2, %v103
    %v105 = vrot.slane %v92, %v104
    %v117 = vunpack.c.l.b16 %v52
    %v118 = vunpack.c.l.b16 %v53
    %v119 = vunpack.c.l.b16 %v54
    %v120 = vunpack.c.l.b16 %v55
    %v121 = vunpack.c.l.b16 %v56
    %v122 = vunpack.c.l.b16 %v57
    %v123 = vunpack.c.l.b16 %v58
    %v124 = vunpack.c.l.b16 %v59
    %v125 = vpack.c.b16 %v118, %v117
    %v126 = vpack.c.b16 %v120, %v119
    %v127 = vpack.c.b16 %v122, %v121
    %v128 = vpack.c.b16 %v124, %v123
    %v165 = vunpack.c.l.b16 %v60
    %v166 = vunpack.c.h.b16 %v60
    %v167 = vunpack.c.l.b16 %v61
    %v168 = vunpack.c.l.b16 %v62
    %v169 = vunpack.c.h.b16 %v62
    %v170 = vunpack.c.l.b16 %v63
    %v171 = vunpack.c.l.b16 %v64
    %v172 = vunpack.c.h.b16 %v64
    %v173 = vunpack.c.l.b16 %v65
    %v174 = vunpack.c.l.b16 %v66
    %v175 = vunpack.c.h.b16 %v66
    %v176 = vunpack.c.l.b16 %v67
    %v177 = vunpack.c.l.b16 %v68
    %v178 = vunpack.c.h.b16 %v68
    %v179 = vunpack.c.l.b16 %v69
    %v180 = vunpack.c.l.b16 %v70
    %v181 = vunpack.c.h.b16 %v70
    %v182 = vunpack.c.l.b16 %v71
    %v183 = vunpack.c.l.b16 %v72
    %v184 = vunpack.c.h.b16 %v72
    %v185 = vunpack.c.l.b16 %v73
    %v186 = vunpack.c.l.b16 %v74
    %v187 = vunpack.c.h.b16 %v74
    %v188 = vunpack.c.l.b16 %v75
    %v189 = vunpack.c.l.b16 %v76
    %v190 = vunpack.c.h.b16 %v76
    %v191 = vunpack.c.l.b16 %v77
    %v192 = vunpack.c.l.b16 %v78
    %v193 = vunpack.c.h.b16 %v78
    %v194 = vunpack.c.l.b16 %v79
    %v195 = vunpack.c.l.b16 %v80
    %v196 = vunpack.c.h.b16 %v80
    %v197 = vunpack.c.l.b16 %v81
    %v198 = vunpack.c.l.b16 %v82
    %v199 = vunpack.c.h.b16 %v82
    %v200 = vunpack.c.l.b16 %v83
    %v201 = vunpack.c.l.b16 %v84
    %v202 = vunpack.c.h.b16 %v84
    %v203 = vunpack.c.l.b16 %v85
    %v204 = vunpack.c.l.b16 %v86
    %v205 = vunpack.c.h.b16 %v86
    %v206 = vunpack.c.l.b16 %v87
    %v207 = vunpack.c.l.b16 %v88
    %v208 = vunpack.c.h.b16 %v88
    %v209 = vunpack.c.l.b16 %v89
    %v210 = vunpack.c.l.b16 %v90
    %v211 = vunpack.c.h.b16 %v90
    %v212 = vunpack.c.l.b16 %v91
    %v213 = vpack.c.b16 %v168, %v165
    %v214 = vpack.c.b16 %v169, %v166
    %v215 = vpack.c.b16 %v170, %v167
    %v216 = vpack.c.b16 %v174, %v171
    %v217 = vpack.c.b16 %v175, %v172
    %v218 = vpack.c.b16 %v176, %v173
    %v219 = vpack.c.b16 %v180, %v177
    %v220 = vpack.c.b16 %v181, %v178
    %v221 = vpack.c.b16 %v182, %v179
    %v222 = vpack.c.b16 %v186, %v183
    %v223 = vpack.c.b16 %v187, %v184
    %v224 = vpack.c.b16 %v188, %v185
    %v225 = vpack.c.b16 %v192, %v189
    %v226 = vpack.c.b16 %v193, %v190
    %v227 = vpack.c.b16 %v194, %v191
    %v228 = vpack.c.b16 %v198, %v195
    %v229 = vpack.c.b16 %v199, %v196
    %v230 = vpack.c.b16 %v200, %v197
    %v231 = vpack.c.b16 %v204, %v201
    %v232 = vpack.c.b16 %v205, %v202
    %v233 = vpack.c.b16 %v206, %v203
    %v234 = vpack.c.b16 %v210, %v207
    %v235 = vpack.c.b16 %v211, %v208
    %v236 = vpack.c.b16 %v212, %v209
    %261 = vmatprep.subr.bf16.mxu0 %v214
    %262 = vmatpush1.bf16.msra.mxu0 %v213
    %263 = vmatprep.subr.bf16.mxu0 %v217
    %264 = vmatpush1.bf16.msra.mxu0 %v216
    %265 = vmatprep.subr.bf16.mxu0 %v220
    %266 = vmatpush1.bf16.msra.mxu0 %v219
    %267 = vmatprep.subr.bf16.mxu0 %v223
    %268 = vmatpush1.bf16.msra.mxu0 %v222
    %269 = vmatprep.subr.bf16.mxu0 %v226
    %270 = vmatpush1.bf16.msra.mxu0 %v225
    %271 = vmatprep.subr.bf16.mxu0 %v229
    %272 = vmatpush1.bf16.msra.mxu0 %v228
    %273 = vmatprep.subr.bf16.mxu0 %v232
    %274 = vmatpush1.bf16.msra.mxu0 %v231
    %275 = vmatprep.subr.bf16.mxu0 %v235
    %276 = vmatpush1.bf16.msra.mxu0 %v234
    %277 = vmatprep.subr.bf16.mxu0 0
    %278 = vmatpush1.bf16.msra.mxu0 0
    %279 = vmatprep.subr.bf16.mxu0 0
    %280 = vmatpush1.bf16.msra.mxu0 0
    %281 = vmatprep.subr.bf16.mxu0 0
    %282 = vmatpush1.bf16.msra.mxu0 0
    %283 = vmatprep.subr.bf16.mxu0 0
    %284 = vmatpush1.bf16.msra.mxu0 0
    %285 = vmatprep.subr.bf16.mxu0 0
    %286 = vmatpush1.bf16.msra.mxu0 0
    %287 = vmatprep.subr.bf16.mxu0 0
    %288 = vmatpush1.bf16.msra.mxu0 0
    %289 = vmatprep.subr.bf16.mxu0 0
    %290 = vmatpush1.bf16.msra.mxu0 0
    %291 = vmatprep.subr.bf16.mxu0 0
    %292 = vmatpush1.bf16.msra.mxu0 0
    %293 = vmatprep.mubr.bf16.mxu0 0
    %294 = vmatmul.mubr.bf16.gmra.mrb[0].mxu0 %v125
    %v295 = vpop.f32.mrb[0].mxu0
    %v296 = vadd.f32 %v97, %v295
    %v297 = vpop.f32.mrb[0].mxu0
    %v298 = vadd.f32 %v101, %v297
    %v299 = vpop.f32.mrb[0].mxu0
    %v300 = vadd.f32 %v97, %v299
    %v301 = vpop.f32.mrb[0].mxu0
    %v302 = vadd.f32 %v101, %v301
    %303 = vmatprep.mubr.bf16.mxu0 0
    %304 = vmatmul.mubr.bf16.gmra.mrb[0].mxu0 %v126
    %v305 = vpop.f32.mrb[0].mxu0
    %v306 = vadd.f32 %v97, %v305
    %v307 = vpop.f32.mrb[0].mxu0
    %v308 = vadd.f32 %v101, %v307
    %v309 = vpop.f32.mrb[0].mxu0
    %v310 = vadd.f32 %v97, %v309
    %v311 = vpop.f32.mrb[0].mxu0
    %v312 = vadd.f32 %v101, %v311
    %313 = vmatprep.mubr.bf16.mxu0 0
    %314 = vmatmul.mubr.bf16.gmra.mrb[0].mxu0 %v127
    %v315 = vpop.f32.mrb[0].mxu0
    %v316 = vadd.f32 %v97, %v315
    %v317 = vpop.f32.mrb[0].mxu0
    %v318 = vadd.f32 %v101, %v317
    %v319 = vpop.f32.mrb[0].mxu0
    %v320 = vadd.f32 %v97, %v319
    %v321 = vpop.f32.mrb[0].mxu0
    %v322 = vadd.f32 %v101, %v321
    %323 = vmatprep.mubr.bf16.mxu0 0
    %324 = vmatmul.mubr.bf16.gmra.mrb[0].mxu0 %v128
    %v325 = vpop.f32.mrb[0].mxu0
    %v326 = vadd.f32 %v97, %v325
    %v327 = vpop.f32.mrb[0].mxu0
    %v328 = vadd.f32 %v101, %v327
    %v329 = vpop.f32.mrb[0].mxu0
    %v330 = vadd.f32 %v97, %v329
    %v331 = vpop.f32.mrb[0].mxu0
    %v332 = vadd.f32 %v101, %v331
    %333 = vdwg.mxu0
    %334 = vmatprep.subr.bf16.mxu0 0
    %335 = vmatpush1.bf16.msra.mxu0 %v215
    %336 = vmatprep.subr.bf16.mxu0 0
    %337 = vmatpush1.bf16.msra.mxu0 %v218
    %338 = vmatprep.subr.bf16.mxu0 0
    %339 = vmatpush1.bf16.msra.mxu0 %v221
    %340 = vmatprep.subr.bf16.mxu0 0
    %341 = vmatpush1.bf16.msra.mxu0 %v224
    %342 = vmatprep.subr.bf16.mxu0 0
    %343 = vmatpush1.bf16.msra.mxu0 %v227
    %344 = vmatprep.subr.bf16.mxu0 0
    %345 = vmatpush1.bf16.msra.mxu0 %v230
    %346 = vmatprep.subr.bf16.mxu0 0
    %347 = vmatpush1.bf16.msra.mxu0 %v233
    %348 = vmatprep.subr.bf16.mxu0 0
    %349 = vmatpush1.bf16.msra.mxu0 %v236
    %350 = vmatprep.subr.bf16.mxu0 0
    %351 = vmatpush1.bf16.msra.mxu0 0
    %352 = vmatprep.subr.bf16.mxu0 0
    %353 = vmatpush1.bf16.msra.mxu0 0
    %354 = vmatprep.subr.bf16.mxu0 0
    %355 = vmatpush1.bf16.msra.mxu0 0
    %356 = vmatprep.subr.bf16.mxu0 0
    %357 = vmatpush1.bf16.msra.mxu0 0
    %358 = vmatprep.subr.bf16.mxu0 0
    %359 = vmatpush1.bf16.msra.mxu0 0
    %360 = vmatprep.subr.bf16.mxu0 0
    %361 = vmatpush1.bf16.msra.mxu0 0
    %362 = vmatprep.subr.bf16.mxu0 0
    %363 = vmatpush1.bf16.msra.mxu0 0
    %364 = vmatprep.subr.bf16.mxu0 0
    %365 = vmatpush1.bf16.msra.mxu0 0
    %366 = vmatprep.mubr.bf16.mxu0 0
    %367 = vmatmul.mubr.bf16.gmra.mrb[0].mxu0 %v125
    %v368 = vpop.f32.mrb[0].mxu0
    %v369 = vadd.f32 %v105, %v368
    %v370 = vpop.f32.mrb[0].mxu0
    %v371 = vpop.f32.mrb[0].mxu0
    %v372 = vadd.f32 %v105, %v371
    %v373 = vpop.f32.mrb[0].mxu0
    %374 = vmatprep.mubr.bf16.mxu0 0
    %375 = vmatmul.mubr.bf16.gmra.mrb[0].mxu0 %v126
    %v376 = vpop.f32.mrb[0].mxu0
    %v377 = vadd.f32 %v105, %v376
    %v378 = vpop.f32.mrb[0].mxu0
    %v379 = vpop.f32.mrb[0].mxu0
    %v380 = vadd.f32 %v105, %v379
    %v381 = vpop.f32.mrb[0].mxu0
    %382 = vmatprep.mubr.bf16.mxu0 0
    %383 = vmatmul.mubr.bf16.gmra.mrb[0].mxu0 %v127
    %v384 = vpop.f32.mrb[0].mxu0
    %v385 = vadd.f32 %v105, %v384
    %v386 = vpop.f32.mrb[0].mxu0
    %v387 = vpop.f32.mrb[0].mxu0
    %v388 = vadd.f32 %v105, %v387
    %v389 = vpop.f32.mrb[0].mxu0
    %390 = vmatprep.mubr.bf16.mxu0 0
    %391 = vmatmul.mubr.bf16.gmra.mrb[0].mxu0 %v128
    %v392 = vpop.f32.mrb[0].mxu0
    %v393 = vadd.f32 %v105, %v392
    %v394 = vpop.f32.mrb[0].mxu0
    %v395 = vpop.f32.mrb[0].mxu0
    %v396 = vadd.f32 %v105, %v395
    %v397 = vpop.f32.mrb[0].mxu0
    %398 = vdwg.mxu0
    %399 = vst [vmem:[#allocation2] sm:$0xff] %v296
    %400 = vst [vmem:[#allocation2 + $0x8] sm:$0xff] %v298
    %401 = vst [vmem:[#allocation2 + $0x10] sm:$0xff] %v369
    %402 = vst [vmem:[#allocation2 + $0x18] sm:$0xff] %v300
    %403 = vst [vmem:[#allocation2 + $0x20] sm:$0xff] %v302
    %404 = vst [vmem:[#allocation2 + $0x28] sm:$0xff] %v372
    %405 = vst [vmem:[#allocation2 + $0x30] sm:$0xff] %v306
    %406 = vst [vmem:[#allocation2 + $0x38] sm:$0xff] %v308
    %407 = vst [vmem:[#allocation2 + $0x40] sm:$0xff] %v377
    %408 = vst [vmem:[#allocation2 + $0x48] sm:$0xff] %v310
    %409 = vst [vmem:[#allocation2 + $0x50] sm:$0xff] %v312
    %410 = vst [vmem:[#allocation2 + $0x58] sm:$0xff] %v380
    %411 = vst [vmem:[#allocation2 + $0x60] sm:$0xff] %v316
    %412 = vst [vmem:[#allocation2 + $0x68] sm:$0xff] %v318
    %413 = vst [vmem:[#allocation2 + $0x70] sm:$0xff] %v385
    %414 = vst [vmem:[#allocation2 + $0x78] sm:$0xff] %v320
    %415 = vst [vmem:[#allocation2 + $0x80] sm:$0xff] %v322
    %416 = vst [vmem:[#allocation2 + $0x88] sm:$0xff] %v388
    %417 = vst [vmem:[#allocation2 + $0x90] sm:$0xff] %v326
    %418 = vst [vmem:[#allocation2 + $0x98] sm:$0xff] %v328
    %419 = vst [vmem:[#allocation2 + $0xa0] sm:$0xff] %v393
    %420 = vst [vmem:[#allocation2 + $0xa8] sm:$0xff] %v330
    %421 = vst [vmem:[#allocation2 + $0xb0] sm:$0xff] %v332
    %422 = vst [vmem:[#allocation2 + $0xb8] sm:$0xff] %v396
    %v423 = vld [vmem:[%s1] sm:$0xff]
    %v424 = vld [vmem:[#allocation5] sm:$0xff]
    %v425 = vld [vmem:[#allocation5 + $0x8] sm:$0xf]
    %v426 = vld [vmem:[#allocation5 + $0xc] sm:$0xff]
    %v427 = vld [vmem:[#allocation5 + $0x14] sm:$0xf]
    %v428 = vld [vmem:[#allocation5 + $0x18] sm:$0xff]
    %v429 = vld [vmem:[#allocation5 + $0x20] sm:$0xf]
    %v430 = vld [vmem:[#allocation5 + $0x24] sm:$0xff]
    %v431 = vld [vmem:[#allocation5 + $0x2c] sm:$0xf]
    %v432 = vld [vmem:[#allocation5 + $0x30] sm:$0xff]
    %v433 = vld [vmem:[#allocation5 + $0x38] sm:$0xf]
    %v434 = vld [vmem:[#allocation5 + $0x3c] sm:$0xff]
    %v435 = vld [vmem:[#allocation5 + $0x44] sm:$0xf]
    %v436 = vld [vmem:[#allocation5 + $0x48] sm:$0xff]
    %v437 = vld [vmem:[#allocation5 + $0x50] sm:$0xf]
    %v438 = vld [vmem:[#allocation5 + $0x54] sm:$0xff]
    %v439 = vld [vmem:[#allocation5 + $0x5c] sm:$0xf]
    %v440 = vld [vmem:[#allocation5 + $0x60] sm:$0xff]
    %v441 = vld [vmem:[#allocation5 + $0x68] sm:$0xf]
    %v442 = vld [vmem:[#allocation5 + $0x6c] sm:$0xff]
    %v443 = vld [vmem:[#allocation5 + $0x74] sm:$0xf]
    %v444 = vld [vmem:[#allocation5 + $0x78] sm:$0xff]
    %v445 = vld [vmem:[#allocation5 + $0x80] sm:$0xf]
    %v446 = vld [vmem:[#allocation5 + $0x84] sm:$0xff]
    %v447 = vld [vmem:[#allocation5 + $0x8c] sm:$0xf]
    %v448 = vld [vmem:[#allocation5 + $0x90] sm:$0xff]
    %v449 = vld [vmem:[#allocation5 + $0x98] sm:$0xf]
    %v450 = vld [vmem:[#allocation5 + $0x9c] sm:$0xff]
    %v451 = vld [vmem:[#allocation5 + $0xa4] sm:$0xf]
    %v452 = vld [vmem:[#allocation5 + $0xa8] sm:$0xff]
    %v453 = vld [vmem:[#allocation5 + $0xb0] sm:$0xf]
    %v454 = vld [vmem:[#allocation5 + $0xb4] sm:$0xff]
    %v455 = vld [vmem:[#allocation5 + $0xbc] sm:$0xf]
    %v456 = vld [vmem:[%s5] sm:$0x1]
    %v458 = vlaneseq
    %v459 = vshrl.u32 %v458, 7
    %v460 = vsub.s32 0, %v459
    %v461 = vrot.slane %v456, %v460
    %v463 = vld [vmem:[#allocation2] sm:$0xff]
    %v464 = vld [vmem:[#allocation2 + $0x8] sm:$0xff]
    %v465 = vld [vmem:[#allocation2 + $0x10] sm:$0xff]
    %v466 = vpack.c.bf16 %v423, %v423
    %v499 = vunpack.c.l.b16 %v424
    %v500 = vunpack.c.h.b16 %v424
    %v501 = vunpack.c.l.b16 %v425
    %v502 = vunpack.c.l.b16 %v426
    %v503 = vunpack.c.h.b16 %v426
    %v504 = vunpack.c.l.b16 %v427
    %v505 = vunpack.c.l.b16 %v428
    %v506 = vunpack.c.h.b16 %v428
    %v507 = vunpack.c.l.b16 %v429
    %v508 = vunpack.c.l.b16 %v430
    %v509 = vunpack.c.h.b16 %v430
    %v510 = vunpack.c.l.b16 %v431
    %v511 = vunpack.c.l.b16 %v432
    %v512 = vunpack.c.h.b16 %v432
    %v513 = vunpack.c.l.b16 %v433
    %v514 = vunpack.c.l.b16 %v434
    %v515 = vunpack.c.h.b16 %v434
    %v516 = vunpack.c.l.b16 %v435
    %v517 = vunpack.c.l.b16 %v436
    %v518 = vunpack.c.h.b16 %v436
    %v519 = vunpack.c.l.b16 %v437
    %v520 = vunpack.c.l.b16 %v438
    %v521 = vunpack.c.h.b16 %v438
    %v522 = vunpack.c.l.b16 %v439
    %v523 = vunpack.c.l.b16 %v440
    %v524 = vunpack.c.h.b16 %v440
    %v525 = vunpack.c.l.b16 %v441
    %v526 = vunpack.c.l.b16 %v442
    %v527 = vunpack.c.h.b16 %v442
    %v528 = vunpack.c.l.b16 %v443
    %v529 = vunpack.c.l.b16 %v444
    %v530 = vunpack.c.h.b16 %v444
    %v531 = vunpack.c.l.b16 %v445
    %v532 = vunpack.c.l.b16 %v446
    %v533 = vunpack.c.h.b16 %v446
    %v534 = vunpack.c.l.b16 %v447
    %v535 = vunpack.c.l.b16 %v448
    %v536 = vunpack.c.h.b16 %v448
    %v537 = vunpack.c.l.b16 %v449
    %v538 = vunpack.c.l.b16 %v450
    %v539 = vunpack.c.h.b16 %v450
    %v540 = vunpack.c.l.b16 %v451
    %v541 = vunpack.c.l.b16 %v452
    %v542 = vunpack.c.h.b16 %v452
    %v543 = vunpack.c.l.b16 %v453
    %v544 = vunpack.c.l.b16 %v454
    %v545 = vunpack.c.h.b16 %v454
    %v546 = vunpack.c.l.b16 %v455
    %v547 = vpack.c.b16 %v502, %v499
    %v548 = vpack.c.b16 %v503, %v500
    %v549 = vpack.c.b16 %v504, %v501
    %v550 = vpack.c.b16 %v508, %v505
    %v551 = vpack.c.b16 %v509, %v506
    %v552 = vpack.c.b16 %v510, %v507
    %v553 = vpack.c.b16 %v514, %v511
    %v554 = vpack.c.b16 %v515, %v512
    %v555 = vpack.c.b16 %v516, %v513
    %v556 = vpack.c.b16 %v520, %v517
    %v557 = vpack.c.b16 %v521, %v518
    %v558 = vpack.c.b16 %v522, %v519
    %v559 = vpack.c.b16 %v526, %v523
    %v560 = vpack.c.b16 %v527, %v524
    %v561 = vpack.c.b16 %v528, %v525
    %v562 = vpack.c.b16 %v532, %v529
    %v563 = vpack.c.b16 %v533, %v530
    %v564 = vpack.c.b16 %v534, %v531
    %v565 = vpack.c.b16 %v538, %v535
    %v566 = vpack.c.b16 %v539, %v536
    %v567 = vpack.c.b16 %v540, %v537
    %v568 = vpack.c.b16 %v544, %v541
    %v569 = vpack.c.b16 %v545, %v542
    %v570 = vpack.c.b16 %v546, %v543
    %595 = vmatprep.subr.bf16.mxu0 %v548
    %596 = vmatpush1.bf16.msra.mxu0 %v547
    %597 = vmatprep.subr.bf16.mxu0 %v551
    %598 = vmatpush1.bf16.msra.mxu0 %v550
    %599 = vmatprep.subr.bf16.mxu0 %v554
    %600 = vmatpush1.bf16.msra.mxu0 %v553
    %601 = vmatprep.subr.bf16.mxu0 %v557
    %602 = vmatpush1.bf16.msra.mxu0 %v556
    %603 = vmatprep.subr.bf16.mxu0 %v560
    %604 = vmatpush1.bf16.msra.mxu0 %v559
    %605 = vmatprep.subr.bf16.mxu0 %v563
    %606 = vmatpush1.bf16.msra.mxu0 %v562
    %607 = vmatprep.subr.bf16.mxu0 %v566
    %608 = vmatpush1.bf16.msra.mxu0 %v565
    %609 = vmatprep.subr.bf16.mxu0 %v569
    %610 = vmatpush1.bf16.msra.mxu0 %v568
    %611 = vmatprep.subr.bf16.mxu0 0
    %612 = vmatpush1.bf16.msra.mxu0 0
    %613 = vmatprep.subr.bf16.mxu0 0
    %614 = vmatpush1.bf16.msra.mxu0 0
    %615 = vmatprep.subr.bf16.mxu0 0
    %616 = vmatpush1.bf16.msra.mxu0 0
    %617 = vmatprep.subr.bf16.mxu0 0
    %618 = vmatpush1.bf16.msra.mxu0 0
    %619 = vmatprep.subr.bf16.mxu0 0
    %620 = vmatpush1.bf16.msra.mxu0 0
    %621 = vmatprep.subr.bf16.mxu0 0
    %622 = vmatpush1.bf16.msra.mxu0 0
    %623 = vmatprep.subr.bf16.mxu0 0
    %624 = vmatpush1.bf16.msra.mxu0 0
    %625 = vmatprep.subr.bf16.mxu0 0
    %626 = vmatpush1.bf16.msra.mxu0 0
    %627 = vmatprep.mubr.bf16.mxu0 0
    %628 = vmatmul.mubr.bf16.gmra.mrb[0].mxu0 %v466
    %v629 = vpop.f32.mrb[0].mxu0
    %v630 = vadd.f32 0.0, %v629
    %v631 = vpop.f32.mrb[0].mxu0
    %v632 = vadd.f32 0.0, %v631
    %v633 = vpop.f32.mrb[0].mxu0
    %v634 = vpop.f32.mrb[0].mxu0
    %635 = vdwg.mxu0
    %636 = vmatprep.subr.bf16.mxu0 0
    %637 = vmatpush1.bf16.msra.mxu0 %v549
    %638 = vmatprep.subr.bf16.mxu0 0
    %639 = vmatpush1.bf16.msra.mxu0 %v552
    %640 = vmatprep.subr.bf16.mxu0 0
    %641 = vmatpush1.bf16.msra.mxu0 %v555
    %642 = vmatprep.subr.bf16.mxu0 0
    %643 = vmatpush1.bf16.msra.mxu0 %v558
    %644 = vmatprep.subr.bf16.mxu0 0
    %645 = vmatpush1.bf16.msra.mxu0 %v561
    %646 = vmatprep.subr.bf16.mxu0 0
    %647 = vmatpush1.bf16.msra.mxu0 %v564
    %648 = vmatprep.subr.bf16.mxu0 0
    %649 = vmatpush1.bf16.msra.mxu0 %v567
    %650 = vmatprep.subr.bf16.mxu0 0
    %651 = vmatpush1.bf16.msra.mxu0 %v570
    %652 = vmatprep.subr.bf16.mxu0 0
    %653 = vmatpush1.bf16.msra.mxu0 0
    %654 = vmatprep.subr.bf16.mxu0 0
    %655 = vmatpush1.bf16.msra.mxu0 0
    %656 = vmatprep.subr.bf16.mxu0 0
    %657 = vmatpush1.bf16.msra.mxu0 0
    %658 = vmatprep.subr.bf16.mxu0 0
    %659 = vmatpush1.bf16.msra.mxu0 0
    %660 = vmatprep.subr.bf16.mxu0 0
    %661 = vmatpush1.bf16.msra.mxu0 0
    %662 = vmatprep.subr.bf16.mxu0 0
    %663 = vmatpush1.bf16.msra.mxu0 0
    %664 = vmatprep.subr.bf16.mxu0 0
    %665 = vmatpush1.bf16.msra.mxu0 0
    %666 = vmatprep.subr.bf16.mxu0 0
    %667 = vmatpush1.bf16.msra.mxu0 0
    %668 = vmatprep.mubr.bf16.mxu0 0
    %669 = vmatmul.mubr.bf16.gmra.mrb[0].mxu0 %v466
    %v670 = vpop.f32.mrb[0].mxu0
    %v671 = vadd.f32 0.0, %v670
    %v672 = vpop.f32.mrb[0].mxu0
    %v673 = vpop.f32.mrb[0].mxu0
    %v674 = vpop.f32.mrb[0].mxu0
    %675 = vdwg.mxu0
    %v676 = vadd.f32 %v463, %v630
    %v677 = vmul.f32 %v676, 0.5
    %v678 = vtanh.pop %v677
    %v679 = vadd.f32 %v678, 1.0
    %v680 = vmul.f32 %v679, 0.5
    %v681 = vadd.f32 %v464, %v632
    %v682 = vmul.f32 %v681, 0.5
    %v683 = vtanh.pop %v682
    %v684 = vadd.f32 %v683, 1.0
    %v685 = vmul.f32 %v684, 0.5
    %v686 = vadd.f32 %v671, %v461
    %v687 = vmul.f32 %v680, %v686
    %v688 = vadd.f32 %v465, %v687
    %v689 = vtanh.pop %v688
    %v690 = vsub.f32 1.0, %v685
    %v691 = vmul.f32 %v690, %v689
    %v692 = vmul.f32 %v685, %v423
    %v693 = vadd.f32 %v691, %v692
    %v694 = vld [vmem:[#allocation2 + $0x18] sm:$0xff]
    %v695 = vld [vmem:[#allocation2 + $0x20] sm:$0xff]
    %v696 = vld [vmem:[#allocation2 + $0x28] sm:$0xff]
    %v697 = vpack.c.bf16 %v693, %v693
    %698 = vmatprep.subr.bf16.mxu0 %v548
    %699 = vmatpush1.bf16.msra.mxu0 %v547
    %700 = vmatprep.subr.bf16.mxu0 %v551
    %701 = vmatpush1.bf16.msra.mxu0 %v550
    %702 = vmatprep.subr.bf16.mxu0 %v554
    %703 = vmatpush1.bf16.msra.mxu0 %v553
    %704 = vmatprep.subr.bf16.mxu0 %v557
    %705 = vmatpush1.bf16.msra.mxu0 %v556
    %706 = vmatprep.subr.bf16.mxu0 %v560
    %707 = vmatpush1.bf16.msra.mxu0 %v559
    %708 = vmatprep.subr.bf16.mxu0 %v563
    %709 = vmatpush1.bf16.msra.mxu0 %v562
    %710 = vmatprep.subr.bf16.mxu0 %v566
    %711 = vmatpush1.bf16.msra.mxu0 %v565
    %712 = vmatprep.subr.bf16.mxu0 %v569
    %713 = vmatpush1.bf16.msra.mxu0 %v568
    %714 = vmatprep.subr.bf16.mxu0 0
    %715 = vmatpush1.bf16.msra.mxu0 0
    %716 = vmatprep.subr.bf16.mxu0 0
    %717 = vmatpush1.bf16.msra.mxu0 0
    %718 = vmatprep.subr.bf16.mxu0 0
    %719 = vmatpush1.bf16.msra.mxu0 0
    %720 = vmatprep.subr.bf16.mxu0 0
    %721 = vmatpush1.bf16.msra.mxu0 0
    %722 = vmatprep.subr.bf16.mxu0 0
    %723 = vmatpush1.bf16.msra.mxu0 0
    %724 = vmatprep.subr.bf16.mxu0 0
    %725 = vmatpush1.bf16.msra.mxu0 0
    %726 = vmatprep.subr.bf16.mxu0 0
    %727 = vmatpush1.bf16.msra.mxu0 0
    %728 = vmatprep.subr.bf16.mxu0 0
    %729 = vmatpush1.bf16.msra.mxu0 0
    %730 = vmatprep.mubr.bf16.mxu0 0
    %731 = vmatmul.mubr.bf16.gmra.mrb[0].mxu0 %v697
    %v732 = vpop.f32.mrb[0].mxu0
    %v733 = vadd.f32 0.0, %v732
    %v734 = vpop.f32.mrb[0].mxu0
    %v735 = vadd.f32 0.0, %v734
    %v736 = vpop.f32.mrb[0].mxu0
    %v737 = vpop.f32.mrb[0].mxu0
    %738 = vdwg.mxu0
    %739 = vmatprep.subr.bf16.mxu0 0
    %740 = vmatpush1.bf16.msra.mxu0 %v549
    %741 = vmatprep.subr.bf16.mxu0 0
    %742 = vmatpush1.bf16.msra.mxu0 %v552
    %743 = vmatprep.subr.bf16.mxu0 0
    %744 = vmatpush1.bf16.msra.mxu0 %v555
    %745 = vmatprep.subr.bf16.mxu0 0
    %746 = vmatpush1.bf16.msra.mxu0 %v558
    %747 = vmatprep.subr.bf16.mxu0 0
    %748 = vmatpush1.bf16.msra.mxu0 %v561
    %749 = vmatprep.subr.bf16.mxu0 0
    %750 = vmatpush1.bf16.msra.mxu0 %v564
    %751 = vmatprep.subr.bf16.mxu0 0
    %752 = vmatpush1.bf16.msra.mxu0 %v567
    %753 = vmatprep.subr.bf16.mxu0 0
    %754 = vmatpush1.bf16.msra.mxu0 %v570
    %755 = vmatprep.subr.bf16.mxu0 0
    %756 = vmatpush1.bf16.msra.mxu0 0
    %757 = vmatprep.subr.bf16.mxu0 0
    %758 = vmatpush1.bf16.msra.mxu0 0
    %759 = vmatprep.subr.bf16.mxu0 0
    %760 = vmatpush1.bf16.msra.mxu0 0
    %761 = vmatprep.subr.bf16.mxu0 0
    %762 = vmatpush1.bf16.msra.mxu0 0
    %763 = vmatprep.subr.bf16.mxu0 0
    %764 = vmatpush1.bf16.msra.mxu0 0
    %765 = vmatprep.subr.bf16.mxu0 0
    %766 = vmatpush1.bf16.msra.mxu0 0
    %767 = vmatprep.subr.bf16.mxu0 0
    %768 = vmatpush1.bf16.msra.mxu0 0
    %769 = vmatprep.subr.bf16.mxu0 0
    %770 = vmatpush1.bf16.msra.mxu0 0
    %771 = vmatprep.mubr.bf16.mxu0 0
    %772 = vmatmul.mubr.bf16.gmra.mrb[0].mxu0 %v697
    %v773 = vpop.f32.mrb[0].mxu0
    %v774 = vadd.f32 0.0, %v773
    %v775 = vpop.f32.mrb[0].mxu0
    %v776 = vpop.f32.mrb[0].mxu0
    %v777 = vpop.f32.mrb[0].mxu0
    %778 = vdwg.mxu0
    %v779 = vadd.f32 %v694, %v733
    %v780 = vmul.f32 %v779, 0.5
    %v781 = vtanh.pop %v780
    %v782 = vadd.f32 %v781, 1.0
    %v783 = vmul.f32 %v782, 0.5
    %v784 = vadd.f32 %v695, %v735
    %v785 = vmul.f32 %v784, 0.5
    %v786 = vtanh.pop %v785
    %v787 = vadd.f32 %v786, 1.0
    %v788 = vmul.f32 %v787, 0.5
    %v789 = vadd.f32 %v774, %v461
    %v790 = vmul.f32 %v783, %v789
    %v791 = vadd.f32 %v696, %v790
    %v792 = vtanh.pop %v791
    %v793 = vsub.f32 1.0, %v788
    %v794 = vmul.f32 %v793, %v792
    %v795 = vmul.f32 %v788, %v693
    %v796 = vadd.f32 %v794, %v795
    %v797 = vld [vmem:[#allocation2 + $0x30] sm:$0xff]
    %v798 = vld [vmem:[#allocation2 + $0x38] sm:$0xff]
    %v799 = vld [vmem:[#allocation2 + $0x40] sm:$0xff]
    %v800 = vpack.c.bf16 %v796, %v796
    %801 = vmatprep.subr.bf16.mxu0 %v548
    %802 = vmatpush1.bf16.msra.mxu0 %v547
    %803 = vmatprep.subr.bf16.mxu0 %v551
    %804 = vmatpush1.bf16.msra.mxu0 %v550
    %805 = vmatprep.subr.bf16.mxu0 %v554
    %806 = vmatpush1.bf16.msra.mxu0 %v553
    %807 = vmatprep.subr.bf16.mxu0 %v557
    %808 = vmatpush1.bf16.msra.mxu0 %v556
    %809 = vmatprep.subr.bf16.mxu0 %v560
    %810 = vmatpush1.bf16.msra.mxu0 %v559
    %811 = vmatprep.subr.bf16.mxu0 %v563
    %812 = vmatpush1.bf16.msra.mxu0 %v562
    %813 = vmatprep.subr.bf16.mxu0 %v566
    %814 = vmatpush1.bf16.msra.mxu0 %v565
    %815 = vmatprep.subr.bf16.mxu0 %v569
    %816 = vmatpush1.bf16.msra.mxu0 %v568
    %817 = vmatprep.subr.bf16.mxu0 0
    %818 = vmatpush1.bf16.msra.mxu0 0
    %819 = vmatprep.subr.bf16.mxu0 0
    %820 = vmatpush1.bf16.msra.mxu0 0
    %821 = vmatprep.subr.bf16.mxu0 0
    %822 = vmatpush1.bf16.msra.mxu0 0
    %823 = vmatprep.subr.bf16.mxu0 0
    %824 = vmatpush1.bf16.msra.mxu0 0
    %825 = vmatprep.subr.bf16.mxu0 0
    %826 = vmatpush1.bf16.msra.mxu0 0
    %827 = vmatprep.subr.bf16.mxu0 0
    %828 = vmatpush1.bf16.msra.mxu0 0
    %829 = vmatprep.subr.bf16.mxu0 0
    %830 = vmatpush1.bf16.msra.mxu0 0
    %831 = vmatprep.subr.bf16.mxu0 0
    %832 = vmatpush1.bf16.msra.mxu0 0
    %833 = vmatprep.mubr.bf16.mxu0 0
    %834 = vmatmul.mubr.bf16.gmra.mrb[0].mxu0 %v800
    %v835 = vpop.f32.mrb[0].mxu0
    %v836 = vadd.f32 0.0, %v835
    %v837 = vpop.f32.mrb[0].mxu0
    %v838 = vadd.f32 0.0, %v837
    %v839 = vpop.f32.mrb[0].mxu0
    %v840 = vpop.f32.mrb[0].mxu0
    %841 = vdwg.mxu0
    %842 = vmatprep.subr.bf16.mxu0 0
    %843 = vmatpush1.bf16.msra.mxu0 %v549
    %844 = vmatprep.subr.bf16.mxu0 0
    %845 = vmatpush1.bf16.msra.mxu0 %v552
    %846 = vmatprep.subr.bf16.mxu0 0
    %847 = vmatpush1.bf16.msra.mxu0 %v555
    %848 = vmatprep.subr.bf16.mxu0 0
    %849 = vmatpush1.bf16.msra.mxu0 %v558
    %850 = vmatprep.subr.bf16.mxu0 0
    %851 = vmatpush1.bf16.msra.mxu0 %v561
    %852 = vmatprep.subr.bf16.mxu0 0
    %853 = vmatpush1.bf16.msra.mxu0 %v564
    %854 = vmatprep.subr.bf16.mxu0 0
    %855 = vmatpush1.bf16.msra.mxu0 %v567
    %856 = vmatprep.subr.bf16.mxu0 0
    %857 = vmatpush1.bf16.msra.mxu0 %v570
    %858 = vmatprep.subr.bf16.mxu0 0
    %859 = vmatpush1.bf16.msra.mxu0 0
    %860 = vmatprep.subr.bf16.mxu0 0
    %861 = vmatpush1.bf16.msra.mxu0 0
    %862 = vmatprep.subr.bf16.mxu0 0
    %863 = vmatpush1.bf16.msra.mxu0 0
    %864 = vmatprep.subr.bf16.mxu0 0
    %865 = vmatpush1.bf16.msra.mxu0 0
    %866 = vmatprep.subr.bf16.mxu0 0
    %867 = vmatpush1.bf16.msra.mxu0 0
    %868 = vmatprep.subr.bf16.mxu0 0
    %869 = vmatpush1.bf16.msra.mxu0 0
    %870 = vmatprep.subr.bf16.mxu0 0
    %871 = vmatpush1.bf16.msra.mxu0 0
    %872 = vmatprep.subr.bf16.mxu0 0
    %873 = vmatpush1.bf16.msra.mxu0 0
    %874 = vmatprep.mubr.bf16.mxu0 0
    %875 = vmatmul.mubr.bf16.gmra.mrb[0].mxu0 %v800
    %v876 = vpop.f32.mrb[0].mxu0
    %v877 = vadd.f32 0.0, %v876
    %v878 = vpop.f32.mrb[0].mxu0
    %v879 = vpop.f32.mrb[0].mxu0
    %v880 = vpop.f32.mrb[0].mxu0
    %881 = vdwg.mxu0
    %v882 = vadd.f32 %v797, %v836
    %v883 = vmul.f32 %v882, 0.5
    %v884 = vtanh.pop %v883
    %v885 = vadd.f32 %v884, 1.0
    %v886 = vmul.f32 %v885, 0.5
    %v887 = vadd.f32 %v798, %v838
    %v888 = vmul.f32 %v887, 0.5
    %v889 = vtanh.pop %v888
    %v890 = vadd.f32 %v889, 1.0
    %v891 = vmul.f32 %v890, 0.5
    %v892 = vadd.f32 %v877, %v461
    %v893 = vmul.f32 %v886, %v892
    %v894 = vadd.f32 %v799, %v893
    %v895 = vtanh.pop %v894
    %v896 = vsub.f32 1.0, %v891
    %v897 = vmul.f32 %v896, %v895
    %v898 = vmul.f32 %v891, %v796
    %v899 = vadd.f32 %v897, %v898
    %v900 = vld [vmem:[#allocation2 + $0x48] sm:$0xff]
    %v901 = vld [vmem:[#allocation2 + $0x50] sm:$0xff]
    %v902 = vld [vmem:[#allocation2 + $0x58] sm:$0xff]
    %v903 = vpack.c.bf16 %v899, %v899
    %904 = vmatprep.subr.bf16.mxu0 %v548
    %905 = vmatpush1.bf16.msra.mxu0 %v547
    %906 = vmatprep.subr.bf16.mxu0 %v551
    %907 = vmatpush1.bf16.msra.mxu0 %v550
    %908 = vmatprep.subr.bf16.mxu0 %v554
    %909 = vmatpush1.bf16.msra.mxu0 %v553
    %910 = vmatprep.subr.bf16.mxu0 %v557
    %911 = vmatpush1.bf16.msra.mxu0 %v556
    %912 = vmatprep.subr.bf16.mxu0 %v560
    %913 = vmatpush1.bf16.msra.mxu0 %v559
    %914 = vmatprep.subr.bf16.mxu0 %v563
    %915 = vmatpush1.bf16.msra.mxu0 %v562
    %916 = vmatprep.subr.bf16.mxu0 %v566
    %917 = vmatpush1.bf16.msra.mxu0 %v565
    %918 = vmatprep.subr.bf16.mxu0 %v569
    %919 = vmatpush1.bf16.msra.mxu0 %v568
    %920 = vmatprep.subr.bf16.mxu0 0
    %921 = vmatpush1.bf16.msra.mxu0 0
    %922 = vmatprep.subr.bf16.mxu0 0
    %923 = vmatpush1.bf16.msra.mxu0 0
    %924 = vmatprep.subr.bf16.mxu0 0
    %925 = vmatpush1.bf16.msra.mxu0 0
    %926 = vmatprep.subr.bf16.mxu0 0
    %927 = vmatpush1.bf16.msra.mxu0 0
    %928 = vmatprep.subr.bf16.mxu0 0
    %929 = vmatpush1.bf16.msra.mxu0 0
    %930 = vmatprep.subr.bf16.mxu0 0
    %931 = vmatpush1.bf16.msra.mxu0 0
    %932 = vmatprep.subr.bf16.mxu0 0
    %933 = vmatpush1.bf16.msra.mxu0 0
    %934 = vmatprep.subr.bf16.mxu0 0
    %935 = vmatpush1.bf16.msra.mxu0 0
    %936 = vmatprep.mubr.bf16.mxu0 0
    %937 = vmatmul.mubr.bf16.gmra.mrb[0].mxu0 %v903
    %v938 = vpop.f32.mrb[0].mxu0
    %v939 = vadd.f32 0.0, %v938
    %v940 = vpop.f32.mrb[0].mxu0
    %v941 = vadd.f32 0.0, %v940
    %v942 = vpop.f32.mrb[0].mxu0
    %v943 = vpop.f32.mrb[0].mxu0
    %944 = vdwg.mxu0
    %945 = vmatprep.subr.bf16.mxu0 0
    %946 = vmatpush1.bf16.msra.mxu0 %v549
    %947 = vmatprep.subr.bf16.mxu0 0
    %948 = vmatpush1.bf16.msra.mxu0 %v552
    %949 = vmatprep.subr.bf16.mxu0 0
    %950 = vmatpush1.bf16.msra.mxu0 %v555
    %951 = vmatprep.subr.bf16.mxu0 0
    %952 = vmatpush1.bf16.msra.mxu0 %v558
    %953 = vmatprep.subr.bf16.mxu0 0
    %954 = vmatpush1.bf16.msra.mxu0 %v561
    %955 = vmatprep.subr.bf16.mxu0 0
    %956 = vmatpush1.bf16.msra.mxu0 %v564
    %957 = vmatprep.subr.bf16.mxu0 0
    %958 = vmatpush1.bf16.msra.mxu0 %v567
    %959 = vmatprep.subr.bf16.mxu0 0
    %960 = vmatpush1.bf16.msra.mxu0 %v570
    %961 = vmatprep.subr.bf16.mxu0 0
    %962 = vmatpush1.bf16.msra.mxu0 0
    %963 = vmatprep.subr.bf16.mxu0 0
    %964 = vmatpush1.bf16.msra.mxu0 0
    %965 = vmatprep.subr.bf16.mxu0 0
    %966 = vmatpush1.bf16.msra.mxu0 0
    %967 = vmatprep.subr.bf16.mxu0 0
    %968 = vmatpush1.bf16.msra.mxu0 0
    %969 = vmatprep.subr.bf16.mxu0 0
    %970 = vmatpush1.bf16.msra.mxu0 0
    %971 = vmatprep.subr.bf16.mxu0 0
    %972 = vmatpush1.bf16.msra.mxu0 0
    %973 = vmatprep.subr.bf16.mxu0 0
    %974 = vmatpush1.bf16.msra.mxu0 0
    %975 = vmatprep.subr.bf16.mxu0 0
    %976 = vmatpush1.bf16.msra.mxu0 0
    %977 = vmatprep.mubr.bf16.mxu0 0
    %978 = vmatmul.mubr.bf16.gmra.mrb[0].mxu0 %v903
    %v979 = vpop.f32.mrb[0].mxu0
    %v980 = vadd.f32 0.0, %v979
    %v981 = vpop.f32.mrb[0].mxu0
    %v982 = vpop.f32.mrb[0].mxu0
    %v983 = vpop.f32.mrb[0].mxu0
    %984 = vdwg.mxu0
    %v985 = vadd.f32 %v900, %v939
    %v986 = vmul.f32 %v985, 0.5
    %v987 = vtanh.pop %v986
    %v988 = vadd.f32 %v987, 1.0
    %v989 = vmul.f32 %v988, 0.5
    %v990 = vadd.f32 %v901, %v941
    %v991 = vmul.f32 %v990, 0.5
    %v992 = vtanh.pop %v991
    %v993 = vadd.f32 %v992, 1.0
    %v994 = vmul.f32 %v993, 0.5
    %v995 = vadd.f32 %v980, %v461
    %v996 = vmul.f32 %v989, %v995
    %v997 = vadd.f32 %v902, %v996
    %v998 = vtanh.pop %v997
    %v999 = vsub.f32 1.0, %v994
    %v1000 = vmul.f32 %v999, %v998
    %v1001 = vmul.f32 %v994, %v899
    %v1002 = vadd.f32 %v1000, %v1001
    %v1003 = vld [vmem:[#allocation2 + $0x60] sm:$0xff]
    %v1004 = vld [vmem:[#allocation2 + $0x68] sm:$0xff]
    %v1005 = vld [vmem:[#allocation2 + $0x70] sm:$0xff]
    %v1006 = vpack.c.bf16 %v1002, %v1002
    %1007 = vmatprep.subr.bf16.mxu0 %v548
    %1008 = vmatpush1.bf16.msra.mxu0 %v547
    %1009 = vmatprep.subr.bf16.mxu0 %v551
    %1010 = vmatpush1.bf16.msra.mxu0 %v550
    %1011 = vmatprep.subr.bf16.mxu0 %v554
    %1012 = vmatpush1.bf16.msra.mxu0 %v553
    %1013 = vmatprep.subr.bf16.mxu0 %v557
    %1014 = vmatpush1.bf16.msra.mxu0 %v556
    %1015 = vmatprep.subr.bf16.mxu0 %v560
    %1016 = vmatpush1.bf16.msra.mxu0 %v559
    %1017 = vmatprep.subr.bf16.mxu0 %v563
    %1018 = vmatpush1.bf16.msra.mxu0 %v562
    %1019 = vmatprep.subr.bf16.mxu0 %v566
    %1020 = vmatpush1.bf16.msra.mxu0 %v565
    %1021 = vmatprep.subr.bf16.mxu0 %v569
    %1022 = vmatpush1.bf16.msra.mxu0 %v568
    %1023 = vmatprep.subr.bf16.mxu0 0
    %1024 = vmatpush1.bf16.msra.mxu0 0
    %1025 = vmatprep.subr.bf16.mxu0 0
    %1026 = vmatpush1.bf16.msra.mxu0 0
    %1027 = vmatprep.subr.bf16.mxu0 0
    %1028 = vmatpush1.bf16.msra.mxu0 0
    %1029 = vmatprep.subr.bf16.mxu0 0
    %1030 = vmatpush1.bf16.msra.mxu0 0
    %1031 = vmatprep.subr.bf16.mxu0 0
    %1032 = vmatpush1.bf16.msra.mxu0 0
    %1033 = vmatprep.subr.bf16.mxu0 0
    %1034 = vmatpush1.bf16.msra.mxu0 0
    %1035 = vmatprep.subr.bf16.mxu0 0
    %1036 = vmatpush1.bf16.msra.mxu0 0
    %1037 = vmatprep.subr.bf16.mxu0 0
    %1038 = vmatpush1.bf16.msra.mxu0 0
    %1039 = vmatprep.mubr.bf16.mxu0 0
    %1040 = vmatmul.mubr.bf16.gmra.mrb[0].mxu0 %v1006
    %v1041 = vpop.f32.mrb[0].mxu0
    %v1042 = vadd.f32 0.0, %v1041
    %v1043 = vpop.f32.mrb[0].mxu0
    %v1044 = vadd.f32 0.0, %v1043
    %v1045 = vpop.f32.mrb[0].mxu0
    %v1046 = vpop.f32.mrb[0].mxu0
    %1047 = vdwg.mxu0
    %1048 = vmatprep.subr.bf16.mxu0 0
    %1049 = vmatpush1.bf16.msra.mxu0 %v549
    %1050 = vmatprep.subr.bf16.mxu0 0
    %1051 = vmatpush1.bf16.msra.mxu0 %v552
    %1052 = vmatprep.subr.bf16.mxu0 0
    %1053 = vmatpush1.bf16.msra.mxu0 %v555
    %1054 = vmatprep.subr.bf16.mxu0 0
    %1055 = vmatpush1.bf16.msra.mxu0 %v558
    %1056 = vmatprep.subr.bf16.mxu0 0
    %1057 = vmatpush1.bf16.msra.mxu0 %v561
    %1058 = vmatprep.subr.bf16.mxu0 0
    %1059 = vmatpush1.bf16.msra.mxu0 %v564
    %1060 = vmatprep.subr.bf16.mxu0 0
    %1061 = vmatpush1.bf16.msra.mxu0 %v567
    %1062 = vmatprep.subr.bf16.mxu0 0
    %1063 = vmatpush1.bf16.msra.mxu0 %v570
    %1064 = vmatprep.subr.bf16.mxu0 0
    %1065 = vmatpush1.bf16.msra.mxu0 0
    %1066 = vmatprep.subr.bf16.mxu0 0
    %1067 = vmatpush1.bf16.msra.mxu0 0
    %1068 = vmatprep.subr.bf16.mxu0 0
    %1069 = vmatpush1.bf16.msra.mxu0 0
    %1070 = vmatprep.subr.bf16.mxu0 0
    %1071 = vmatpush1.bf16.msra.mxu0 0
    %1072 = vmatprep.subr.bf16.mxu0 0
    %1073 = vmatpush1.bf16.msra.mxu0 0
    %1074 = vmatprep.subr.bf16.mxu0 0
    %1075 = vmatpush1.bf16.msra.mxu0 0
    %1076 = vmatprep.subr.bf16.mxu0 0
    %1077 = vmatpush1.bf16.msra.mxu0 0
    %1078 = vmatprep.subr.bf16.mxu0 0
    %1079 = vmatpush1.bf16.msra.mxu0 0
    %1080 = vmatprep.mubr.bf16.mxu0 0
    %1081 = vmatmul.mubr.bf16.gmra.mrb[0].mxu0 %v1006
    %v1082 = vpop.f32.mrb[0].mxu0
    %v1083 = vadd.f32 0.0, %v1082
    %v1084 = vpop.f32.mrb[0].mxu0
    %v1085 = vpop.f32.mrb[0].mxu0
    %v1086 = vpop.f32.mrb[0].mxu0
    %1087 = vdwg.mxu0
    %v1088 = vadd.f32 %v1003, %v1042
    %v1089 = vmul.f32 %v1088, 0.5
    %v1090 = vtanh.pop %v1089
    %v1091 = vadd.f32 %v1090, 1.0
    %v1092 = vmul.f32 %v1091, 0.5
    %v1093 = vadd.f32 %v1004, %v1044
    %v1094 = vmul.f32 %v1093, 0.5
    %v1095 = vtanh.pop %v1094
    %v1096 = vadd.f32 %v1095, 1.0
    %v1097 = vmul.f32 %v1096, 0.5
    %v1098 = vadd.f32 %v1083, %v461
    %v1099 = vmul.f32 %v1092, %v1098
    %v1100 = vadd.f32 %v1005, %v1099
    %v1101 = vtanh.pop %v1100
    %v1102 = vsub.f32 1.0, %v1097
    %v1103 = vmul.f32 %v1102, %v1101
    %v1104 = vmul.f32 %v1097, %v1002
    %v1105 = vadd.f32 %v1103, %v1104
    %v1106 = vld [vmem:[#allocation2 + $0x78] sm:$0xff]
    %v1107 = vld [vmem:[#allocation2 + $0x80] sm:$0xff]
    %v1108 = vld [vmem:[#allocation2 + $0x88] sm:$0xff]
    %v1109 = vpack.c.bf16 %v1105, %v1105
    %1110 = vmatprep.subr.bf16.mxu0 %v548
    %1111 = vmatpush1.bf16.msra.mxu0 %v547
    %1112 = vmatprep.subr.bf16.mxu0 %v551
    %1113 = vmatpush1.bf16.msra.mxu0 %v550
    %1114 = vmatprep.subr.bf16.mxu0 %v554
    %1115 = vmatpush1.bf16.msra.mxu0 %v553
    %1116 = vmatprep.subr.bf16.mxu0 %v557
    %1117 = vmatpush1.bf16.msra.mxu0 %v556
    %1118 = vmatprep.subr.bf16.mxu0 %v560
    %1119 = vmatpush1.bf16.msra.mxu0 %v559
    %1120 = vmatprep.subr.bf16.mxu0 %v563
    %1121 = vmatpush1.bf16.msra.mxu0 %v562
    %1122 = vmatprep.subr.bf16.mxu0 %v566
    %1123 = vmatpush1.bf16.msra.mxu0 %v565
    %1124 = vmatprep.subr.bf16.mxu0 %v569
    %1125 = vmatpush1.bf16.msra.mxu0 %v568
    %1126 = vmatprep.subr.bf16.mxu0 0
    %1127 = vmatpush1.bf16.msra.mxu0 0
    %1128 = vmatprep.subr.bf16.mxu0 0
    %1129 = vmatpush1.bf16.msra.mxu0 0
    %1130 = vmatprep.subr.bf16.mxu0 0
    %1131 = vmatpush1.bf16.msra.mxu0 0
    %1132 = vmatprep.subr.bf16.mxu0 0
    %1133 = vmatpush1.bf16.msra.mxu0 0
    %1134 = vmatprep.subr.bf16.mxu0 0
    %1135 = vmatpush1.bf16.msra.mxu0 0
    %1136 = vmatprep.subr.bf16.mxu0 0
    %1137 = vmatpush1.bf16.msra.mxu0 0
    %1138 = vmatprep.subr.bf16.mxu0 0
    %1139 = vmatpush1.bf16.msra.mxu0 0
    %1140 = vmatprep.subr.bf16.mxu0 0
    %1141 = vmatpush1.bf16.msra.mxu0 0
    %1142 = vmatprep.mubr.bf16.mxu0 0
    %1143 = vmatmul.mubr.bf16.gmra.mrb[0].mxu0 %v1109
    %v1144 = vpop.f32.mrb[0].mxu0
    %v1145 = vadd.f32 0.0, %v1144
    %v1146 = vpop.f32.mrb[0].mxu0
    %v1147 = vadd.f32 0.0, %v1146
    %v1148 = vpop.f32.mrb[0].mxu0
    %v1149 = vpop.f32.mrb[0].mxu0
    %1150 = vdwg.mxu0
    %1151 = vmatprep.subr.bf16.mxu0 0
    %1152 = vmatpush1.bf16.msra.mxu0 %v549
    %1153 = vmatprep.subr.bf16.mxu0 0
    %1154 = vmatpush1.bf16.msra.mxu0 %v552
    %1155 = vmatprep.subr.bf16.mxu0 0
    %1156 = vmatpush1.bf16.msra.mxu0 %v555
    %1157 = vmatprep.subr.bf16.mxu0 0
    %1158 = vmatpush1.bf16.msra.mxu0 %v558
    %1159 = vmatprep.subr.bf16.mxu0 0
    %1160 = vmatpush1.bf16.msra.mxu0 %v561
    %1161 = vmatprep.subr.bf16.mxu0 0
    %1162 = vmatpush1.bf16.msra.mxu0 %v564
    %1163 = vmatprep.subr.bf16.mxu0 0
    %1164 = vmatpush1.bf16.msra.mxu0 %v567
    %1165 = vmatprep.subr.bf16.mxu0 0
    %1166 = vmatpush1.bf16.msra.mxu0 %v570
    %1167 = vmatprep.subr.bf16.mxu0 0
    %1168 = vmatpush1.bf16.msra.mxu0 0
    %1169 = vmatprep.subr.bf16.mxu0 0
    %1170 = vmatpush1.bf16.msra.mxu0 0
    %1171 = vmatprep.subr.bf16.mxu0 0
    %1172 = vmatpush1.bf16.msra.mxu0 0
    %1173 = vmatprep.subr.bf16.mxu0 0
    %1174 = vmatpush1.bf16.msra.mxu0 0
    %1175 = vmatprep.subr.bf16.mxu0 0
    %1176 = vmatpush1.bf16.msra.mxu0 0
    %1177 = vmatprep.subr.bf16.mxu0 0
    %1178 = vmatpush1.bf16.msra.mxu0 0
    %1179 = vmatprep.subr.bf16.mxu0 0
    %1180 = vmatpush1.bf16.msra.mxu0 0
    %1181 = vmatprep.subr.bf16.mxu0 0
    %1182 = vmatpush1.bf16.msra.mxu0 0
    %1183 = vmatprep.mubr.bf16.mxu0 0
    %1184 = vmatmul.mubr.bf16.gmra.mrb[0].mxu0 %v1109
    %v1185 = vpop.f32.mrb[0].mxu0
    %v1186 = vadd.f32 0.0, %v1185
    %v1187 = vpop.f32.mrb[0].mxu0
    %v1188 = vpop.f32.mrb[0].mxu0
    %v1189 = vpop.f32.mrb[0].mxu0
    %1190 = vdwg.mxu0
    %v1191 = vadd.f32 %v1106, %v1145
    %v1192 = vmul.f32 %v1191, 0.5
    %v1193 = vtanh.pop %v1192
    %v1194 = vadd.f32 %v1193, 1.0
    %v1195 = vmul.f32 %v1194, 0.5
    %v1196 = vadd.f32 %v1107, %v1147
    %v1197 = vmul.f32 %v1196, 0.5
    %v1198 = vtanh.pop %v1197
    %v1199 = vadd.f32 %v1198, 1.0
    %v1200 = vmul.f32 %v1199, 0.5
    %v1201 = vadd.f32 %v1186, %v461
    %v1202 = vmul.f32 %v1195, %v1201
    %v1203 = vadd.f32 %v1108, %v1202
    %v1204 = vtanh.pop %v1203
    %v1205 = vsub.f32 1.0, %v1200
    %v1206 = vmul.f32 %v1205, %v1204
    %v1207 = vmul.f32 %v1200, %v1105
    %v1208 = vadd.f32 %v1206, %v1207
    %v1209 = vld [vmem:[#allocation2 + $0x90] sm:$0xff]
    %v1210 = vld [vmem:[#allocation2 + $0x98] sm:$0xff]
    %v1211 = vld [vmem:[#allocation2 + $0xa0] sm:$0xff]
    %v1212 = vpack.c.bf16 %v1208, %v1208
    %1213 = vmatprep.subr.bf16.mxu0 %v548
    %1214 = vmatpush1.bf16.msra.mxu0 %v547
    %1215 = vmatprep.subr.bf16.mxu0 %v551
    %1216 = vmatpush1.bf16.msra.mxu0 %v550
    %1217 = vmatprep.subr.bf16.mxu0 %v554
    %1218 = vmatpush1.bf16.msra.mxu0 %v553
    %1219 = vmatprep.subr.bf16.mxu0 %v557
    %1220 = vmatpush1.bf16.msra.mxu0 %v556
    %1221 = vmatprep.subr.bf16.mxu0 %v560
    %1222 = vmatpush1.bf16.msra.mxu0 %v559
    %1223 = vmatprep.subr.bf16.mxu0 %v563
    %1224 = vmatpush1.bf16.msra.mxu0 %v562
    %1225 = vmatprep.subr.bf16.mxu0 %v566
    %1226 = vmatpush1.bf16.msra.mxu0 %v565
    %1227 = vmatprep.subr.bf16.mxu0 %v569
    %1228 = vmatpush1.bf16.msra.mxu0 %v568
    %1229 = vmatprep.subr.bf16.mxu0 0
    %1230 = vmatpush1.bf16.msra.mxu0 0
    %1231 = vmatprep.subr.bf16.mxu0 0
    %1232 = vmatpush1.bf16.msra.mxu0 0
    %1233 = vmatprep.subr.bf16.mxu0 0
    %1234 = vmatpush1.bf16.msra.mxu0 0
    %1235 = vmatprep.subr.bf16.mxu0 0
    %1236 = vmatpush1.bf16.msra.mxu0 0
    %1237 = vmatprep.subr.bf16.mxu0 0
    %1238 = vmatpush1.bf16.msra.mxu0 0
    %1239 = vmatprep.subr.bf16.mxu0 0
    %1240 = vmatpush1.bf16.msra.mxu0 0
    %1241 = vmatprep.subr.bf16.mxu0 0
    %1242 = vmatpush1.bf16.msra.mxu0 0
    %1243 = vmatprep.subr.bf16.mxu0 0
    %1244 = vmatpush1.bf16.msra.mxu0 0
    %1245 = vmatprep.mubr.bf16.mxu0 0
    %1246 = vmatmul.mubr.bf16.gmra.mrb[0].mxu0 %v1212
    %v1247 = vpop.f32.mrb[0].mxu0
    %v1248 = vadd.f32 0.0, %v1247
    %v1249 = vpop.f32.mrb[0].mxu0
    %v1250 = vadd.f32 0.0, %v1249
    %v1251 = vpop.f32.mrb[0].mxu0
    %v1252 = vpop.f32.mrb[0].mxu0
    %1253 = vdwg.mxu0
    %1254 = vmatprep.subr.bf16.mxu0 0
    %1255 = vmatpush1.bf16.msra.mxu0 %v549
    %1256 = vmatprep.subr.bf16.mxu0 0
    %1257 = vmatpush1.bf16.msra.mxu0 %v552
    %1258 = vmatprep.subr.bf16.mxu0 0
    %1259 = vmatpush1.bf16.msra.mxu0 %v555
    %1260 = vmatprep.subr.bf16.mxu0 0
    %1261 = vmatpush1.bf16.msra.mxu0 %v558
    %1262 = vmatprep.subr.bf16.mxu0 0
    %1263 = vmatpush1.bf16.msra.mxu0 %v561
    %1264 = vmatprep.subr.bf16.mxu0 0
    %1265 = vmatpush1.bf16.msra.mxu0 %v564
    %1266 = vmatprep.subr.bf16.mxu0 0
    %1267 = vmatpush1.bf16.msra.mxu0 %v567
    %1268 = vmatprep.subr.bf16.mxu0 0
    %1269 = vmatpush1.bf16.msra.mxu0 %v570
    %1270 = vmatprep.subr.bf16.mxu0 0
    %1271 = vmatpush1.bf16.msra.mxu0 0
    %1272 = vmatprep.subr.bf16.mxu0 0
    %1273 = vmatpush1.bf16.msra.mxu0 0
    %1274 = vmatprep.subr.bf16.mxu0 0
    %1275 = vmatpush1.bf16.msra.mxu0 0
    %1276 = vmatprep.subr.bf16.mxu0 0
    %1277 = vmatpush1.bf16.msra.mxu0 0
    %1278 = vmatprep.subr.bf16.mxu0 0
    %1279 = vmatpush1.bf16.msra.mxu0 0
    %1280 = vmatprep.subr.bf16.mxu0 0
    %1281 = vmatpush1.bf16.msra.mxu0 0
    %1282 = vmatprep.subr.bf16.mxu0 0
    %1283 = vmatpush1.bf16.msra.mxu0 0
    %1284 = vmatprep.subr.bf16.mxu0 0
    %1285 = vmatpush1.bf16.msra.mxu0 0
    %1286 = vmatprep.mubr.bf16.mxu0 0
    %1287 = vmatmul.mubr.bf16.gmra.mrb[0].mxu0 %v1212
    %v1288 = vpop.f32.mrb[0].mxu0
    %v1289 = vadd.f32 0.0, %v1288
    %v1290 = vpop.f32.mrb[0].mxu0
    %v1291 = vpop.f32.mrb[0].mxu0
    %v1292 = vpop.f32.mrb[0].mxu0
    %1293 = vdwg.mxu0
    %v1294 = vadd.f32 %v1209, %v1248
    %v1295 = vmul.f32 %v1294, 0.5
    %v1296 = vtanh.pop %v1295
    %v1297 = vadd.f32 %v1296, 1.0
    %v1298 = vmul.f32 %v1297, 0.5
    %v1299 = vadd.f32 %v1210, %v1250
    %v1300 = vmul.f32 %v1299, 0.5
    %v1301 = vtanh.pop %v1300
    %v1302 = vadd.f32 %v1301, 1.0
    %v1303 = vmul.f32 %v1302, 0.5
    %v1304 = vadd.f32 %v1289, %v461
    %v1305 = vmul.f32 %v1298, %v1304
    %v1306 = vadd.f32 %v1211, %v1305
    %v1307 = vtanh.pop %v1306
    %v1308 = vsub.f32 1.0, %v1303
    %v1309 = vmul.f32 %v1308, %v1307
    %v1310 = vmul.f32 %v1303, %v1208
    %v1311 = vadd.f32 %v1309, %v1310
    %v1312 = vld [vmem:[#allocation2 + $0xa8] sm:$0xff]
    %v1313 = vld [vmem:[#allocation2 + $0xb0] sm:$0xff]
    %v1314 = vld [vmem:[#allocation2 + $0xb8] sm:$0xff]
    %v1315 = vpack.c.bf16 %v1311, %v1311
    %1316 = vmatprep.subr.bf16.mxu0 %v548
    %1317 = vmatpush1.bf16.msra.mxu0 %v547
    %1318 = vmatprep.subr.bf16.mxu0 %v551
    %1319 = vmatpush1.bf16.msra.mxu0 %v550
    %1320 = vmatprep.subr.bf16.mxu0 %v554
    %1321 = vmatpush1.bf16.msra.mxu0 %v553
    %1322 = vmatprep.subr.bf16.mxu0 %v557
    %1323 = vmatpush1.bf16.msra.mxu0 %v556
    %1324 = vmatprep.subr.bf16.mxu0 %v560
    %1325 = vmatpush1.bf16.msra.mxu0 %v559
    %1326 = vmatprep.subr.bf16.mxu0 %v563
    %1327 = vmatpush1.bf16.msra.mxu0 %v562
    %1328 = vmatprep.subr.bf16.mxu0 %v566
    %1329 = vmatpush1.bf16.msra.mxu0 %v565
    %1330 = vmatprep.subr.bf16.mxu0 %v569
    %1331 = vmatpush1.bf16.msra.mxu0 %v568
    %1332 = vmatprep.subr.bf16.mxu0 0
    %1333 = vmatpush1.bf16.msra.mxu0 0
    %1334 = vmatprep.subr.bf16.mxu0 0
    %1335 = vmatpush1.bf16.msra.mxu0 0
    %1336 = vmatprep.subr.bf16.mxu0 0
    %1337 = vmatpush1.bf16.msra.mxu0 0
    %1338 = vmatprep.subr.bf16.mxu0 0
    %1339 = vmatpush1.bf16.msra.mxu0 0
    %1340 = vmatprep.subr.bf16.mxu0 0
    %1341 = vmatpush1.bf16.msra.mxu0 0
    %1342 = vmatprep.subr.bf16.mxu0 0
    %1343 = vmatpush1.bf16.msra.mxu0 0
    %1344 = vmatprep.subr.bf16.mxu0 0
    %1345 = vmatpush1.bf16.msra.mxu0 0
    %1346 = vmatprep.subr.bf16.mxu0 0
    %1347 = vmatpush1.bf16.msra.mxu0 0
    %1348 = vmatprep.mubr.bf16.mxu0 0
    %1349 = vmatmul.mubr.bf16.gmra.mrb[0].mxu0 %v1315
    %v1350 = vpop.f32.mrb[0].mxu0
    %v1351 = vadd.f32 0.0, %v1350
    %v1352 = vpop.f32.mrb[0].mxu0
    %v1353 = vadd.f32 0.0, %v1352
    %v1354 = vpop.f32.mrb[0].mxu0
    %v1355 = vpop.f32.mrb[0].mxu0
    %1356 = vdwg.mxu0
    %1357 = vmatprep.subr.bf16.mxu0 0
    %1358 = vmatpush1.bf16.msra.mxu0 %v549
    %1359 = vmatprep.subr.bf16.mxu0 0
    %1360 = vmatpush1.bf16.msra.mxu0 %v552
    %1361 = vmatprep.subr.bf16.mxu0 0
    %1362 = vmatpush1.bf16.msra.mxu0 %v555
    %1363 = vmatprep.subr.bf16.mxu0 0
    %1364 = vmatpush1.bf16.msra.mxu0 %v558
    %1365 = vmatprep.subr.bf16.mxu0 0
    %1366 = vmatpush1.bf16.msra.mxu0 %v561
    %1367 = vmatprep.subr.bf16.mxu0 0
    %1368 = vmatpush1.bf16.msra.mxu0 %v564
    %1369 = vmatprep.subr.bf16.mxu0 0
    %1370 = vmatpush1.bf16.msra.mxu0 %v567
    %1371 = vmatprep.subr.bf16.mxu0 0
    %1372 = vmatpush1.bf16.msra.mxu0 %v570
    %1373 = vmatprep.subr.bf16.mxu0 0
    %1374 = vmatpush1.bf16.msra.mxu0 0
    %1375 = vmatprep.subr.bf16.mxu0 0
    %1376 = vmatpush1.bf16.msra.mxu0 0
    %1377 = vmatprep.subr.bf16.mxu0 0
    %1378 = vmatpush1.bf16.msra.mxu0 0
    %1379 = vmatprep.subr.bf16.mxu0 0
    %1380 = vmatpush1.bf16.msra.mxu0 0
    %1381 = vmatprep.subr.bf16.mxu0 0
    %1382 = vmatpush1.bf16.msra.mxu0 0
    %1383 = vmatprep.subr.bf16.mxu0 0
    %1384 = vmatpush1.bf16.msra.mxu0 0
    %1385 = vmatprep.subr.bf16.mxu0 0
    %1386 = vmatpush1.bf16.msra.mxu0 0
    %1387 = vmatprep.subr.bf16.mxu0 0
    %1388 = vmatpush1.bf16.msra.mxu0 0
    %1389 = vmatprep.mubr.bf16.mxu0 0
    %1390 = vmatmul.mubr.bf16.gmra.mrb[0].mxu0 %v1315
    %v1391 = vpop.f32.mrb[0].mxu0
    %v1392 = vadd.f32 0.0, %v1391
    %v1393 = vpop.f32.mrb[0].mxu0
    %v1394 = vpop.f32.mrb[0].mxu0
    %v1395 = vpop.f32.mrb[0].mxu0
    %1396 = vdwg.mxu0
    %v1397 = vadd.f32 %v1312, %v1351
    %v1398 = vmul.f32 %v1397, 0.5
    %v1399 = vtanh.pop %v1398
    %v1400 = vadd.f32 %v1399, 1.0
    %v1401 = vmul.f32 %v1400, 0.5
    %v1402 = vadd.f32 %v1313, %v1353
    %v1403 = vmul.f32 %v1402, 0.5
    %v1404 = vtanh.pop %v1403
    %v1405 = vadd.f32 %v1404, 1.0
    %v1406 = vmul.f32 %v1405, 0.5
    %v1407 = vadd.f32 %v1392, %v461
    %v1408 = vmul.f32 %v1401, %v1407
    %v1409 = vadd.f32 %v1314, %v1408
    %v1410 = vtanh.pop %v1409
    %v1411 = vsub.f32 1.0, %v1406
    %v1412 = vmul.f32 %v1411, %v1410
    %v1413 = vmul.f32 %v1406, %v1311
    %v1414 = vadd.f32 %v1412, %v1413
    %1415 = vst [vmem:[%s6] sm:$0xff] %v1414
    // Predicated region
    $region34: #{vrnn_forward.1} parent=1 // pred_check
      _
    $region35: #{vrnn_forward.1} parent=1 // pred_check_branch
      %1417 = sbr.rel (0) target = $region37
    $region36: #{vrnn_forward.1} parent=1 // pred_region
      _
    $region37: #{vrnn_forward.1} parent=1 // pred_fallthru
      _
    // Predicated region
    $region38: #{vrnn_forward.1} parent=1 // pred_check
      _
    $region39: #{vrnn_forward.1} parent=1 // pred_check_branch
      %1419 = sbr.rel (0) target = $region41
    $region40: #{vrnn_forward.1} parent=1 // pred_region
      _
    $region41: #{vrnn_forward.1} parent=1 // pred_fallthru
      _
    %1420 = vsyncpa [#allocation4], 1
    %1421 = vsyncpa [#allocation6], 1

</llo_original>
